<compile_context>
chip_gen: v7x
topology: tpu7x:2x2x1
jax: 0.10.0
libtpu: 0.0.40
codegen_flags: <defaults>
</compile_context>

<pallas_src>
import jax
import jax.numpy as jnp
from jax.experimental import pallas as pl
from jax.experimental.pallas import tpu as pltpu


def _adapt_kernel(x_ref, wa_ref, ba_ref, w2_ref, b2_ref, w4_ref, b4_ref, o_ref):
  """One grid step = one (C, tT) slab of one batch element (native layout)."""
  C = x_ref.shape[0]
  x = x_ref[...]                                   # (C, tT), input dtype
  xm = x.astype(wa_ref.dtype)                      # MXU operand dtype (bf16/f32)

  # Fused first layers of both branches: [W1; W3] @ x -> (2C + C//4, tT).
  ha = jnp.dot(wa_ref[...], xm, preferred_element_type=jnp.float32) + ba_ref[...]
  ha = jnp.maximum(ha, 0.0)                        # ReLU (Dropout = id in eval)
  h = ha[: 2 * C, :]                               # FFN hidden   (2C,   tT)
  g = ha[2 * C:, :]                                # gate hidden  (C//4, tT)

  # Second layers (f32 accumulation).
  rev = jnp.dot(w2_ref[...], h.astype(w2_ref.dtype),
                preferred_element_type=jnp.float32) + b2_ref[...]        # (C, tT)
  gate = jax.nn.sigmoid(
      jnp.dot(w4_ref[...], g.astype(w4_ref.dtype),
              preferred_element_type=jnp.float32) + b4_ref[...])         # (C, tT)

  # gate * x + (1 - gate) * rev  ==  rev + gate * (x - rev)
  xf = x if x.dtype == jnp.float32 else x.astype(jnp.float32)
  o_ref[...] = (rev + gate * (xf - rev)).astype(o_ref.dtype)


def pack_adapt_params(params, weight_dtype=jnp.bfloat16):
  """Pack PyTorch-layout Linear params for the kernel.

  params = (w1, b1, w2, b2, w3, b3, w4, b4) with weights in nn.Linear layout
  (out_features, in_features) and biases of shape (out_features,).
  """
  w1, b1, w2, b2, w3, b3, w4, b4 = params
  wa = jnp.concatenate([w1, w3], axis=0).astype(weight_dtype)   # (2C + C//4, C)
  ba = jnp.concatenate([b1, b3], axis=0)[:, None].astype(jnp.float32)
  return (wa, ba,
          w2.astype(weight_dtype), b2[:, None].astype(jnp.float32),
          w4.astype(weight_dtype), b4[:, None].astype(jnp.float32))


def _pick_time_tile(B, C, T, itemsize, max_time_tile):
  """Largest lane-aligned time tile that divides T and fits the VMEM budget."""
  if T % 128 != 0:
    return T        # single full-extent (possibly masked) time block, no padding
  def footprint(tt):
    io = 4 * C * tt * itemsize                          # x + out, double-buffered
    tmp = (2 * C + max(C // 4, 1) + 6 * C) * tt * 4     # rough f32 intermediates
    return io + tmp
  budget = 20 << 20                 # stay well under v7x's 64 MiB physical VMEM
  tt = max(128, (min(T, max_time_tile) // 128) * 128)
  while tt > 128 and (T % tt != 0 or footprint(tt) > budget):
    tt -= 128
  # Keep >= 2 grid steps so both v7x TensorCores get work (free on v5e/v6e).
  if B * (T // tt) < 2 and tt % 256 == 0:
    tt //= 2
  return tt


# Flipped to False the first time pl.Buffered(1) is rejected by this jax/pallas.
_SINGLE_BUFFER_WEIGHTS = [True]


def _apply_adapt(signal, packed_params, *, max_time_tile=2048):
  """signal: (B, C, T) -> (B, C, T), eval-mode adapter forward."""
  B, C, T = signal.shape
  wa, ba, w2, b2, w4, b4 = packed_params
  assert wa.shape[1] == C and w2.shape == (C, 2 * C), "params/signal mismatch"
  Ca = wa.shape[0]                                    # 2C + C//4

  tt = _pick_time_tile(B, C, T, signal.dtype.itemsize, max_time_tile)
  grid = (B, T // tt)

  weight_bytes = sum(int(a.size) * a.dtype.itemsize
                     for a in (wa, ba, w2, b2, w4, b4))
  tile_bytes = 4 * C * tt * signal.dtype.itemsize + (Ca + 6 * C) * tt * 4
  vmem_limit = int(min(48 << 20,
                       max(32 << 20, 2 * weight_bytes + 2 * tile_bytes + (4 << 20))))

  def run(single_buffer_weights):
    wkw = {"pipeline_mode": pl.Buffered(1)} if single_buffer_weights else {}

    def wspec(shape):
      # Constant index_map: weights/biases stay VMEM-resident across the grid.
      return pl.BlockSpec(shape, lambda b, t: (0, 0), **wkw)

    grid_spec = pltpu.PrefetchScalarGridSpec(
        num_scalar_prefetch=0,
        grid=grid,
        in_specs=[
            pl.BlockSpec((None, C, tt), lambda b, t: (b, 0, t)),   # x slab
            wspec(wa.shape), wspec(ba.shape),                      # [W1;W3], [b1;b3]
            wspec(w2.shape), wspec(b2.shape),                      # W2, b2
            wspec(w4.shape), wspec(b4.shape),                      # W4, b4
        ],
        out_specs=pl.BlockSpec((None, C, tt), lambda b, t: (b, 0, t)),
    )
    return pl.pallas_call(
        _adapt_kernel,
        out_shape=jax.ShapeDtypeStruct((B, C, T), signal.dtype),
        grid_spec=grid_spec,
        compiler_params=pltpu.CompilerParams(
            dimension_semantics=("parallel", "parallel"),
            vmem_limit_bytes=vmem_limit),
    )(signal, wa, ba, w2, b2, w4, b4)

  if _SINGLE_BUFFER_WEIGHTS[0]:
    try:
      return run(True)
    except Exception:      # pl.Buffered(1) unsupported on this jax -> default buffering
      _SINGLE_BUFFER_WEIGHTS[0] = False
  return run(False)


def adapt_layer_activations_forward(x, packed_params):
  """Mirrors AdaptLayerActivations.forward (use_bilstm=False, use_gating=True).

  x = (list_of_signals, signal_length); each signal is (B, C, T).
  """
  signals, signal_length = x
  residual = list(signals[:-1]) if len(signals) > 1 else []
  revised = _apply_adapt(signals[-1], packed_params)
  return (residual + [revised], signal_length)


def _make_params(key, feat_in, dtype=jnp.float32):
  """Random nn.Linear params in PyTorch layout: W (fout, fin), b (fout,)."""
  ks = jax.random.split(key, 8)
  c, c2, cq = feat_in, 2 * feat_in, feat_in // 4
  def lin(kw, kb, fin, fout):
    s = 1.0 / jnp.sqrt(jnp.float32(fin))
    return (jax.random.uniform(kw, (fout, fin), dtype, -s, s),
            jax.random.uniform(kb, (fout,), dtype, -s, s))
  w1, b1 = lin(ks[0], ks[1], c, c2)
  w2, b2 = lin(ks[2], ks[3], c2, c)
  w3, b3 = lin(ks[4], ks[5], c, cq)
  w4, b4 = lin(ks[6], ks[7], cq, c)
  return (w1, b1, w2, b2, w3, b3, w4, b4)


def _reference(signal, params):
  """Pure-JAX f32 reference of the eval-mode forward."""
  w1, b1, w2, b2, w3, b3, w4, b4 = params
  hp = jax.lax.Precision.HIGHEST
  s = jnp.transpose(signal, (0, 2, 1)).astype(jnp.float32)
  h = jnp.maximum(jnp.dot(s, w1.T, precision=hp) + b1, 0.0)
  rev = jnp.dot(h, w2.T, precision=hp) + b2
  g = jnp.maximum(jnp.dot(s, w3.T, precision=hp) + b3, 0.0)
  gate = jax.nn.sigmoid(jnp.dot(g, w4.T, precision=hp) + b4)
  out = gate * s + (1.0 - gate) * rev
  return jnp.transpose(out, (0, 2, 1)).astype(signal.dtype)


if __name__ == "__main__":
  key = jax.random.PRNGKey(0)
  k_data, k_prev, k_par, k_rag = jax.random.split(key, 4)

  B, C, T = 2, 32, 256                      # batch, feat_in, time
  signal = jax.random.normal(k_data, (B, C, T), dtype=jnp.float32)
  prev_signal = jax.random.normal(k_prev, (B, C, T), dtype=jnp.float32)
  signal_length = jnp.full((B,), T, dtype=jnp.int32)
  params = _make_params(k_par, C)           # PyTorch nn.Linear layout

  # --- default fast path: bf16 MXU operands, f32 accumulation -----------------
  packed_bf16 = pack_adapt_params(params, jnp.bfloat16)
  out_signals, out_len = adapt_layer_activations_forward(
      ([prev_signal, signal], signal_length), packed_bf16)
  out = jax.block_until_ready(out_signals[-1])

  assert len(out_signals) == 2 and out_signals[0] is prev_signal
  assert out.shape == signal.shape and out.dtype == signal.dtype
  assert out_len is signal_length
  ref = _reference(signal, params)
  err = float(jnp.max(jnp.abs(out - ref)))
  assert jnp.allclose(out, ref, atol=5e-2, rtol=5e-2), err   # bf16-matmul tolerance

  # --- full-f32 path + ragged T (not a multiple of 128 -> full-extent block) --
  B2, T2 = 1, 80
  sig2 = jax.random.normal(k_rag, (B2, C, T2), dtype=jnp.float32)
  packed_f32 = pack_adapt_params(params, jnp.float32)
  out2 = jax.block_until_ready(_apply_adapt(sig2, packed_f32))
  ref2 = _reference(sig2, params)
  err2 = float(jnp.max(jnp.abs(out2 - ref2)))
  assert jnp.allclose(out2, ref2, atol=5e-3, rtol=5e-3), err2

  print("KERNEL_OK")
</pallas_src>

<mosaic_0001>
module attributes {stable_mosaic.version = 11 : i64} {
  func.func @_adapt_kernel(%arg0: i32, %arg1: i32, %arg2: memref<1x32x256xf32, #tpu.memory_space<vmem>>, %arg3: memref<72x32xbf16, #tpu.memory_space<vmem>>, %arg4: memref<72x1xf32, #tpu.memory_space<vmem>>, %arg5: memref<32x64xbf16, #tpu.memory_space<vmem>>, %arg6: memref<32x1xf32, #tpu.memory_space<vmem>>, %arg7: memref<32x8xbf16, #tpu.memory_space<vmem>>, %arg8: memref<32x1xf32, #tpu.memory_space<vmem>>, %arg9: memref<1x32x256xf32, #tpu.memory_space<vmem>>) attributes {dimension_semantics = [#tpu.dimension_semantics<parallel>, #tpu.dimension_semantics<parallel>], iteration_bounds = array<i64: 2, 1>, scalar_prefetch = 0 : i64, scratch_operands = 0 : i64, tpu.core_type = #tpu.core_type<tc>, window_params = [{transform_indices = @transform_0, window_bounds = array<i64: 1, 32, 256>}, {pipeline_mode = #tpu.pipeline_mode<synchronous>, transform_indices = @transform_1, window_bounds = array<i64: 72, 32>}, {pipeline_mode = #tpu.pipeline_mode<synchronous>, transform_indices = @transform_2, window_bounds = array<i64: 72, 1>}, {pipeline_mode = #tpu.pipeline_mode<synchronous>, transform_indices = @transform_3, window_bounds = array<i64: 32, 64>}, {pipeline_mode = #tpu.pipeline_mode<synchronous>, transform_indices = @transform_4, window_bounds = array<i64: 32, 1>}, {pipeline_mode = #tpu.pipeline_mode<synchronous>, transform_indices = @transform_5, window_bounds = array<i64: 32, 8>}, {pipeline_mode = #tpu.pipeline_mode<synchronous>, transform_indices = @transform_6, window_bounds = array<i64: 32, 1>}, {transform_indices = @transform_7, window_bounds = array<i64: 1, 32, 256>}]} {
    %c0 = arith.constant 0 : index
    %c0_0 = arith.constant 0 : index
    %c0_1 = arith.constant 0 : index
    %0 = vector.load %arg2[%c0, %c0_0, %c0_1] : memref<1x32x256xf32, #tpu.memory_space<vmem>>, vector<1x32x256xf32>
    %1 = vector.shape_cast %0 : vector<1x32x256xf32> to vector<32x256xf32>
    %2 = arith.truncf %1 : vector<32x256xf32> to vector<32x256xbf16>
    %c0_2 = arith.constant 0 : index
    %c0_3 = arith.constant 0 : index
    %3 = vector.load %arg3[%c0_2, %c0_3] : memref<72x32xbf16, #tpu.memory_space<vmem>>, vector<72x32xbf16>
    %cst = arith.constant dense<0.000000e+00> : vector<72x256xf32>
    %4 = tpu.matmul %3, %2, %cst {dimension_numbers = #tpu.dot_dimension_numbers<[1], [0], [0], [1], [0, 0, 1, 1], [], []>} : vector<72x32xbf16>, vector<32x256xbf16>, vector<72x256xf32> -> vector<72x256xf32>
    %c0_4 = arith.constant 0 : index
    %c0_5 = arith.constant 0 : index
    %5 = vector.load %arg4[%c0_4, %c0_5] : memref<72x1xf32, #tpu.memory_space<vmem>>, vector<72x1xf32>
    %6 = vector.broadcast %5 : vector<72x1xf32> to vector<72x256xf32>
    %7 = arith.addf %4, %6 : vector<72x256xf32>
    %cst_6 = arith.constant 0.000000e+00 : f32
    %8 = vector.broadcast %cst_6 : f32 to vector<72x256xf32>
    %9 = arith.maximumf %7, %8 : vector<72x256xf32>
    %10 = vector.extract_strided_slice %9 {offsets = [0, 0], sizes = [64, 256], strides = [1, 1]} : vector<72x256xf32> to vector<64x256xf32>
    %11 = vector.extract_strided_slice %9 {offsets = [64, 0], sizes = [8, 256], strides = [1, 1]} : vector<72x256xf32> to vector<8x256xf32>
    %c0_7 = arith.constant 0 : index
    %c0_8 = arith.constant 0 : index
    %12 = vector.load %arg5[%c0_7, %c0_8] : memref<32x64xbf16, #tpu.memory_space<vmem>>, vector<32x64xbf16>
    %13 = arith.truncf %10 : vector<64x256xf32> to vector<64x256xbf16>
    %cst_9 = arith.constant dense<0.000000e+00> : vector<32x256xf32>
    %14 = tpu.matmul %12, %13, %cst_9 {dimension_numbers = #tpu.dot_dimension_numbers<[1], [0], [0], [1], [0, 0, 1, 1], [], []>} : vector<32x64xbf16>, vector<64x256xbf16>, vector<32x256xf32> -> vector<32x256xf32>
    %c0_10 = arith.constant 0 : index
    %c0_11 = arith.constant 0 : index
    %15 = vector.load %arg6[%c0_10, %c0_11] : memref<32x1xf32, #tpu.memory_space<vmem>>, vector<32x1xf32>
    %16 = vector.broadcast %15 : vector<32x1xf32> to vector<32x256xf32>
    %17 = arith.addf %14, %16 : vector<32x256xf32>
    %c0_12 = arith.constant 0 : index
    %c0_13 = arith.constant 0 : index
    %18 = vector.load %arg7[%c0_12, %c0_13] : memref<32x8xbf16, #tpu.memory_space<vmem>>, vector<32x8xbf16>
    %19 = arith.truncf %11 : vector<8x256xf32> to vector<8x256xbf16>
    %cst_14 = arith.constant dense<0.000000e+00> : vector<32x256xf32>
    %20 = tpu.matmul %18, %19, %cst_14 {dimension_numbers = #tpu.dot_dimension_numbers<[1], [0], [0], [1], [0, 0, 1, 1], [], []>} : vector<32x8xbf16>, vector<8x256xbf16>, vector<32x256xf32> -> vector<32x256xf32>
    %c0_15 = arith.constant 0 : index
    %c0_16 = arith.constant 0 : index
    %21 = vector.load %arg8[%c0_15, %c0_16] : memref<32x1xf32, #tpu.memory_space<vmem>>, vector<32x1xf32>
    %22 = vector.broadcast %21 : vector<32x1xf32> to vector<32x256xf32>
    %23 = arith.addf %20, %22 : vector<32x256xf32>
    %24 = arith.negf %23 : vector<32x256xf32>
    %25 = math.exp %24 : vector<32x256xf32>
    %cst_17 = arith.constant 1.000000e+00 : f32
    %26 = vector.broadcast %cst_17 : f32 to vector<32x256xf32>
    %27 = arith.addf %26, %25 : vector<32x256xf32>
    %28 = arith.divf %26, %27 : vector<32x256xf32>
    %29 = arith.subf %1, %17 : vector<32x256xf32>
    %30 = arith.mulf %28, %29 : vector<32x256xf32>
    %31 = arith.addf %17, %30 : vector<32x256xf32>
    %c0_18 = arith.constant 0 : index
    %c0_19 = arith.constant 0 : index
    %c0_20 = arith.constant 0 : index
    %32 = vector.load %arg9[%c0_18, %c0_19, %c0_20] : memref<1x32x256xf32, #tpu.memory_space<vmem>>, vector<1x32x256xf32>
    %33 = vector.shape_cast %32 : vector<1x32x256xf32> to vector<32x256xf32>
    %34 = vector.shape_cast %31 : vector<32x256xf32> to vector<1x32x256xf32>
    tpu.vector_store %arg9[%c0_18, %c0_19, %c0_20], %34 {strides = array<i32>} : memref<1x32x256xf32, #tpu.memory_space<vmem>>, vector<1x32x256xf32>,
    return
  }
  func.func @transform_0(%arg0: i32, %arg1: i32) -> (i32, i32, i32) {
    %c0_i32 = arith.constant 0 : i32
    %c0_i32_0 = arith.constant 0 : i32
    return %arg0, %c0_i32, %arg1 : i32, i32, i32
  }
  func.func @transform_1(%arg0: i32, %arg1: i32) -> (i32, i32) {
    %c0_i32 = arith.constant 0 : i32
    %c0_i32_0 = arith.constant 0 : i32
    %c0_i32_1 = arith.constant 0 : i32
    return %c0_i32, %c0_i32_0 : i32, i32
  }
  func.func @transform_2(%arg0: i32, %arg1: i32) -> (i32, i32) {
    %c0_i32 = arith.constant 0 : i32
    %c0_i32_0 = arith.constant 0 : i32
    %c0_i32_1 = arith.constant 0 : i32
    return %c0_i32, %c0_i32_0 : i32, i32
  }
  func.func @transform_3(%arg0: i32, %arg1: i32) -> (i32, i32) {
    %c0_i32 = arith.constant 0 : i32
    %c0_i32_0 = arith.constant 0 : i32
    %c0_i32_1 = arith.constant 0 : i32
    return %c0_i32, %c0_i32_0 : i32, i32
  }
  func.func @transform_4(%arg0: i32, %arg1: i32) -> (i32, i32) {
    %c0_i32 = arith.constant 0 : i32
    %c0_i32_0 = arith.constant 0 : i32
    %c0_i32_1 = arith.constant 0 : i32
    return %c0_i32, %c0_i32_0 : i32, i32
  }
  func.func @transform_5(%arg0: i32, %arg1: i32) -> (i32, i32) {
    %c0_i32 = arith.constant 0 : i32
    %c0_i32_0 = arith.constant 0 : i32
    %c0_i32_1 = arith.constant 0 : i32
    return %c0_i32, %c0_i32_0 : i32, i32
  }
  func.func @transform_6(%arg0: i32, %arg1: i32) -> (i32, i32) {
    %c0_i32 = arith.constant 0 : i32
    %c0_i32_0 = arith.constant 0 : i32
    %c0_i32_1 = arith.constant 0 : i32
    return %c0_i32, %c0_i32_0 : i32, i32
  }
  func.func @transform_7(%arg0: i32, %arg1: i32) -> (i32, i32, i32) {
    %c0_i32 = arith.constant 0 : i32
    %c0_i32_0 = arith.constant 0 : i32
    return %arg0, %c0_i32, %arg1 : i32, i32, i32
  }
}

module attributes {stable_mosaic.version = 11 : i64} {
  func.func @_adapt_kernel(%arg0: i32, %arg1: i32, %arg2: memref<1x32x256xf32, #tpu.memory_space<vmem>>, %arg3: memref<72x32xbf16, #tpu.memory_space<vmem>>, %arg4: memref<72x1xf32, #tpu.memory_space<vmem>>, %arg5: memref<32x64xbf16, #tpu.memory_space<vmem>>, %arg6: memref<32x1xf32, #tpu.memory_space<vmem>>, %arg7: memref<32x8xbf16, #tpu.memory_space<vmem>>, %arg8: memref<32x1xf32, #tpu.memory_space<vmem>>, %arg9: memref<1x32x256xf32, #tpu.memory_space<vmem>>) attributes {dimension_semantics = [#tpu.dimension_semantics<parallel>, #tpu.dimension_semantics<parallel>], iteration_bounds = array<i64: 2, 1>, scalar_prefetch = 0 : i64, scratch_operands = 0 : i64, tpu.core_type = #tpu.core_type<tc>, window_params = [{transform_indices = @transform_0, window_bounds = array<i64: 1, 32, 256>}, {pipeline_mode = #tpu.pipeline_mode<synchronous>, transform_indices = @transform_1, window_bounds = array<i64: 72, 32>}, {pipeline_mode = #tpu.pipeline_mode<synchronous>, transform_indices = @transform_2, window_bounds = array<i64: 72, 1>}, {pipeline_mode = #tpu.pipeline_mode<synchronous>, transform_indices = @transform_3, window_bounds = array<i64: 32, 64>}, {pipeline_mode = #tpu.pipeline_mode<synchronous>, transform_indices = @transform_4, window_bounds = array<i64: 32, 1>}, {pipeline_mode = #tpu.pipeline_mode<synchronous>, transform_indices = @transform_5, window_bounds = array<i64: 32, 8>}, {pipeline_mode = #tpu.pipeline_mode<synchronous>, transform_indices = @transform_6, window_bounds = array<i64: 32, 1>}, {transform_indices = @transform_7, window_bounds = array<i64: 1, 32, 256>}]} {
    %c0 = arith.constant 0 : index
    %c0_0 = arith.constant 0 : index
    %c0_1 = arith.constant 0 : index
    %0 = vector.load %arg2[%c0, %c0_0, %c0_1] : memref<1x32x256xf32, #tpu.memory_space<vmem>>, vector<1x32x256xf32>
    %1 = vector.shape_cast %0 : vector<1x32x256xf32> to vector<32x256xf32>
    %2 = arith.truncf %1 : vector<32x256xf32> to vector<32x256xbf16>
    %c0_2 = arith.constant 0 : index
    %c0_3 = arith.constant 0 : index
    %3 = vector.load %arg3[%c0_2, %c0_3] : memref<72x32xbf16, #tpu.memory_space<vmem>>, vector<72x32xbf16>
    %cst = arith.constant dense<0.000000e+00> : vector<72x256xf32>
    %4 = tpu.matmul %3, %2, %cst {dimension_numbers = #tpu.dot_dimension_numbers<[1], [0], [0], [1], [0, 0, 1, 1], [], []>} : vector<72x32xbf16>, vector<32x256xbf16>, vector<72x256xf32> -> vector<72x256xf32>
    %c0_4 = arith.constant 0 : index
    %c0_5 = arith.constant 0 : index
    %5 = vector.load %arg4[%c0_4, %c0_5] : memref<72x1xf32, #tpu.memory_space<vmem>>, vector<72x1xf32>
    %6 = vector.broadcast %5 : vector<72x1xf32> to vector<72x256xf32>
    %7 = arith.addf %4, %6 : vector<72x256xf32>
    %cst_6 = arith.constant 0.000000e+00 : f32
    %8 = vector.broadcast %cst_6 : f32 to vector<72x256xf32>
    %9 = arith.maximumf %7, %8 : vector<72x256xf32>
    %10 = vector.extract_strided_slice %9 {offsets = [0, 0], sizes = [64, 256], strides = [1, 1]} : vector<72x256xf32> to vector<64x256xf32>
    %11 = vector.extract_strided_slice %9 {offsets = [64, 0], sizes = [8, 256], strides = [1, 1]} : vector<72x256xf32> to vector<8x256xf32>
    %c0_7 = arith.constant 0 : index
    %c0_8 = arith.constant 0 : index
    %12 = vector.load %arg5[%c0_7, %c0_8] : memref<32x64xbf16, #tpu.memory_space<vmem>>, vector<32x64xbf16>
    %13 = arith.truncf %10 : vector<64x256xf32> to vector<64x256xbf16>
    %cst_9 = arith.constant dense<0.000000e+00> : vector<32x256xf32>
    %14 = tpu.matmul %12, %13, %cst_9 {dimension_numbers = #tpu.dot_dimension_numbers<[1], [0], [0], [1], [0, 0, 1, 1], [], []>} : vector<32x64xbf16>, vector<64x256xbf16>, vector<32x256xf32> -> vector<32x256xf32>
    %c0_10 = arith.constant 0 : index
    %c0_11 = arith.constant 0 : index
    %15 = vector.load %arg6[%c0_10, %c0_11] : memref<32x1xf32, #tpu.memory_space<vmem>>, vector<32x1xf32>
    %16 = vector.broadcast %15 : vector<32x1xf32> to vector<32x256xf32>
    %17 = arith.addf %14, %16 : vector<32x256xf32>
    %c0_12 = arith.constant 0 : index
    %c0_13 = arith.constant 0 : index
    %18 = vector.load %arg7[%c0_12, %c0_13] : memref<32x8xbf16, #tpu.memory_space<vmem>>, vector<32x8xbf16>
    %19 = arith.truncf %11 : vector<8x256xf32> to vector<8x256xbf16>
    %cst_14 = arith.constant dense<0.000000e+00> : vector<32x256xf32>
    %20 = tpu.matmul %18, %19, %cst_14 {dimension_numbers = #tpu.dot_dimension_numbers<[1], [0], [0], [1], [0, 0, 1, 1], [], []>} : vector<32x8xbf16>, vector<8x256xbf16>, vector<32x256xf32> -> vector<32x256xf32>
    %c0_15 = arith.constant 0 : index
    %c0_16 = arith.constant 0 : index
    %21 = vector.load %arg8[%c0_15, %c0_16] : memref<32x1xf32, #tpu.memory_space<vmem>>, vector<32x1xf32>
    %22 = vector.broadcast %21 : vector<32x1xf32> to vector<32x256xf32>
    %23 = arith.addf %20, %22 : vector<32x256xf32>
    %24 = arith.negf %23 : vector<32x256xf32>
    %25 = math.exp %24 : vector<32x256xf32>
    %cst_17 = arith.constant 1.000000e+00 : f32
    %26 = vector.broadcast %cst_17 : f32 to vector<32x256xf32>
    %27 = arith.addf %26, %25 : vector<32x256xf32>
    %28 = arith.divf %26, %27 : vector<32x256xf32>
    %29 = arith.subf %1, %17 : vector<32x256xf32>
    %30 = arith.mulf %28, %29 : vector<32x256xf32>
    %31 = arith.addf %17, %30 : vector<32x256xf32>
    %c0_18 = arith.constant 0 : index
    %c0_19 = arith.constant 0 : index
    %c0_20 = arith.constant 0 : index
    %32 = vector.load %arg9[%c0_18, %c0_19, %c0_20] : memref<1x32x256xf32, #tpu.memory_space<vmem>>, vector<1x32x256xf32>
    %33 = vector.shape_cast %32 : vector<1x32x256xf32> to vector<32x256xf32>
    %34 = vector.shape_cast %31 : vector<32x256xf32> to vector<1x32x256xf32>
    tpu.vector_store %arg9[%c0_18, %c0_19, %c0_20], %34 {strides = array<i32>} : memref<1x32x256xf32, #tpu.memory_space<vmem>>, vector<1x32x256xf32>,
    return
  }
  func.func @transform_0(%arg0: i32, %arg1: i32) -> (i32, i32, i32) {
    %c0_i32 = arith.constant 0 : i32
    %c0_i32_0 = arith.constant 0 : i32
    return %arg0, %c0_i32, %arg1 : i32, i32, i32
  }
  func.func @transform_1(%arg0: i32, %arg1: i32) -> (i32, i32) {
    %c0_i32 = arith.constant 0 : i32
    %c0_i32_0 = arith.constant 0 : i32
    %c0_i32_1 = arith.constant 0 : i32
    return %c0_i32, %c0_i32_0 : i32, i32
  }
  func.func @transform_2(%arg0: i32, %arg1: i32) -> (i32, i32) {
    %c0_i32 = arith.constant 0 : i32
    %c0_i32_0 = arith.constant 0 : i32
    %c0_i32_1 = arith.constant 0 : i32
    return %c0_i32, %c0_i32_0 : i32, i32
  }
  func.func @transform_3(%arg0: i32, %arg1: i32) -> (i32, i32) {
    %c0_i32 = arith.constant 0 : i32
    %c0_i32_0 = arith.constant 0 : i32
    %c0_i32_1 = arith.constant 0 : i32
    return %c0_i32, %c0_i32_0 : i32, i32
  }
  func.func @transform_4(%arg0: i32, %arg1: i32) -> (i32, i32) {
    %c0_i32 = arith.constant 0 : i32
    %c0_i32_0 = arith.constant 0 : i32
    %c0_i32_1 = arith.constant 0 : i32
    return %c0_i32, %c0_i32_0 : i32, i32
  }
  func.func @transform_5(%arg0: i32, %arg1: i32) -> (i32, i32) {
    %c0_i32 = arith.constant 0 : i32
    %c0_i32_0 = arith.constant 0 : i32
    %c0_i32_1 = arith.constant 0 : i32
    return %c0_i32, %c0_i32_0 : i32, i32
  }
  func.func @transform_6(%arg0: i32, %arg1: i32) -> (i32, i32) {
    %c0_i32 = arith.constant 0 : i32
    %c0_i32_0 = arith.constant 0 : i32
    %c0_i32_1 = arith.constant 0 : i32
    return %c0_i32, %c0_i32_0 : i32, i32
  }
  func.func @transform_7(%arg0: i32, %arg1: i32) -> (i32, i32, i32) {
    %c0_i32 = arith.constant 0 : i32
    %c0_i32_0 = arith.constant 0 : i32
    return %arg0, %c0_i32, %arg1 : i32, i32, i32
  }
}

</mosaic_0001>

<llo_original>
// kernel: tpu_custom_call.1
$region0: #{tpu_custom_call.1}
  #allocation0 [shape = 'u32[]', space=smem, size = 0x4, offset = 0x4, fixed_abs, tag = 'smem constant byte address 0x4 - core index']
  #allocation1 [shape = 'u32[144,128]{1,0:T(1,128)}', space=vmem, size = 0x12000, scoped, tag = 'internal scratch']
  %s0 = inlined_call_operand.vmem [shape: f32[2,32,256], index: 0, kind: input, shape index: {}]
  %s1 = inlined_call_operand.vmem [shape: bf16[72,32], index: 1, kind: input, shape index: {}]
  %s2 = inlined_call_operand.vmem [shape: f32[72,1], index: 2, kind: input, shape index: {}]
  %s3 = inlined_call_operand.vmem [shape: bf16[32,64], index: 3, kind: input, shape index: {}]
  %s4 = inlined_call_operand.vmem [shape: f32[32,1], index: 4, kind: input, shape index: {}]
  %s5 = inlined_call_operand.vmem [shape: bf16[32,8], index: 5, kind: input, shape index: {}]
  %s6 = inlined_call_operand.vmem [shape: f32[32,1], index: 6, kind: input, shape index: {}]
  %s7 = inlined_call_operand.hbm [shape: f32[2,32,256], index: 7, kind: output, shape index: {}]
  %s8 = sld [smem:[#allocation0]]
  $region61: #{tpu_custom_call.1} parent=0
    _
  %s10 = ssub.s32 1, %s8
  %s11 = scalar_select 0, %s10, %s8
  $region1: #{tpu_custom_call.1} parent=0
    #allocation2 [shape = 'u8[65536]{0}', space=vmem, size = 0x10000, scoped, tag = 'output window, operand 0']
    #allocation3 [shape = 's32[2]{0}', space=sflag, size = 0x8, scoped, tag = 'scoped memory for tpu_custom_call.1']
    %12 = vsyncpa [#allocation3], 0
    %s13 = scalar_lea.sflag [#allocation3], 1
    %14 = vsyncpa %s13, 0
    loop: start=0, step=1, limit=4
    $region2: #{tpu_custom_call.1} parent=1 // loop_pre_header
      _
    $region3: #{tpu_custom_call.1} parent=1 // loop_header
      %s16 = sphi 0, %s20
      %p17 = scmp.ge.s32.totalorder %s16, 4
      %s23 = sphi 0, %s35
      %s24 = sphi 0, %s31
      %s25 = sphi 0, %s23
      %s26 = sphi 0, %s24
      %s27 = sphi 0, %s25
      %s28 = sphi 0, %s26
      %s40 = sphi 0, %s42
      %s43 = sphi 0, %s40
      %s44 = sphi 0, %s43
      %s60 = sphi 0, %s44
      %s64 = sphi 0, %s64
      %s66 = sphi 0, %s64
      %s67 = sphi 0, %s66
      %s81 = sphi 0, %s67
      %s85 = sphi 0, %s85
      %s87 = sphi 0, %s85
      %s88 = sphi 0, %s87
      %s102 = sphi 0, %s88
      %s106 = sphi 0, %s106
      %s108 = sphi 0, %s106
      %s109 = sphi 0, %s108
      %s123 = sphi 0, %s109
      %s127 = sphi 0, %s127
      %s129 = sphi 0, %s127
      %s130 = sphi 0, %s129
      %s144 = sphi 0, %s130
      %s148 = sphi 0, %s148
      %s150 = sphi 0, %s148
      %s151 = sphi 0, %s150
      %s165 = sphi 0, %s151
      %s169 = sphi 0, %s169
      %s171 = sphi 0, %s169
      %s172 = sphi 0, %s171
      %s186 = sphi 0, %s172
      %s194 = sphi 0, %s196
      %s197 = sphi 0, %s194
      %s198 = sphi 0, %s197
      %s214 = sphi 0, %s198
    $region4: #{tpu_custom_call.1} parent=1 // loop_header_branch
      %19 = sbr.rel (%p17) target = $region8
    $region5: #{tpu_custom_call.1} parent=1 // loop_body
      %s21 = ssub.s32 %s16, 1
      %s22 = ssub.s32 %s16, 2
      %s29 = sadd.s32 1, %s24
      %p30 = scmp.ge.s32.totalorder %s29, 1
      %s31 = scalar_select %p30, 0, %s29
      %s32 = sadd.s32 1, %s23
      %s33 = scalar_select %p30, %s32, %s23
      %p34 = scmp.ge.s32.totalorder %s33, 2
      %s35 = scalar_select %p34, 0, %s33
      %s36 = ssub.s32 %s23, %s35
      %s37 = ssub.s32 %s24, %s31
      %s38 = sor.u32 %s36, %s37
      %p39 = scmp.eq.s32.totalorder %s38, 0
      %s41 = sadd.s32 %s40, 1
      %s42 = scalar_select %p39, %s40, %s41
      %p45 = pneg %p39
      %p46 = scmp.eq.s32.totalorder %s16, 1
      %p47 = por %p45, %p46
      %p48 = scmp.ne.s32.totalorder %s40, %s43
      %p49 = scmp.eq.s32.totalorder %s16, 0
      %p50 = por %p48, %p49
      %p51 = scmp.ne.s32.totalorder %s40, %s43
      %p52 = scmp.eq.s32.totalorder %s21, 1
      %p53 = por %p51, %p52
      %p54 = scmp.ne.s32.totalorder %s43, %s44
      %p55 = scmp.eq.s32.totalorder %s21, 0
      %p56 = por %p54, %p55
      %p57 = scmp.ne.s32.totalorder %s43, %s44
      %p58 = scmp.eq.s32.totalorder %s22, 1
      %p59 = por %p57, %p58
      %p61 = scmp.ne.s32.totalorder %s44, %s60
      %p62 = scmp.eq.s32.totalorder %s22, 0
      %p63 = por %p61, %p62
      %s65 = sadd.s32 %s64, 1
      %p68 = scmp.eq.s32.totalorder %s16, 1
      %p69 = scmp.ne.s32.totalorder %s64, %s66
      %p70 = scmp.eq.s32.totalorder %s16, 0
      %p71 = por %p69, %p70
      %p72 = scmp.ne.s32.totalorder %s64, %s66
      %p73 = scmp.eq.s32.totalorder %s21, 1
      %p74 = por %p72, %p73
      %p75 = scmp.ne.s32.totalorder %s66, %s67
      %p76 = scmp.eq.s32.totalorder %s21, 0
      %p77 = por %p75, %p76
      %p78 = scmp.ne.s32.totalorder %s66, %s67
      %p79 = scmp.eq.s32.totalorder %s22, 1
      %p80 = por %p78, %p79
      %p82 = scmp.ne.s32.totalorder %s67, %s81
      %p83 = scmp.eq.s32.totalorder %s22, 0
      %p84 = por %p82, %p83
      %s86 = sadd.s32 %s85, 1
      %p89 = scmp.eq.s32.totalorder %s16, 1
      %p90 = scmp.ne.s32.totalorder %s85, %s87
      %p91 = scmp.eq.s32.totalorder %s16, 0
      %p92 = por %p90, %p91
      %p93 = scmp.ne.s32.totalorder %s85, %s87
      %p94 = scmp.eq.s32.totalorder %s21, 1
      %p95 = por %p93, %p94
      %p96 = scmp.ne.s32.totalorder %s87, %s88
      %p97 = scmp.eq.s32.totalorder %s21, 0
      %p98 = por %p96, %p97
      %p99 = scmp.ne.s32.totalorder %s87, %s88
      %p100 = scmp.eq.s32.totalorder %s22, 1
      %p101 = por %p99, %p100
      %p103 = scmp.ne.s32.totalorder %s88, %s102
      %p104 = scmp.eq.s32.totalorder %s22, 0
      %p105 = por %p103, %p104
      %s107 = sadd.s32 %s106, 1
      %p110 = scmp.eq.s32.totalorder %s16, 1
      %p111 = scmp.ne.s32.totalorder %s106, %s108
      %p112 = scmp.eq.s32.totalorder %s16, 0
      %p113 = por %p111, %p112
      %p114 = scmp.ne.s32.totalorder %s106, %s108
      %p115 = scmp.eq.s32.totalorder %s21, 1
      %p116 = por %p114, %p115
      %p117 = scmp.ne.s32.totalorder %s108, %s109
      %p118 = scmp.eq.s32.totalorder %s21, 0
      %p119 = por %p117, %p118
      %p120 = scmp.ne.s32.totalorder %s108, %s109
      %p121 = scmp.eq.s32.totalorder %s22, 1
      %p122 = por %p120, %p121
      %p124 = scmp.ne.s32.totalorder %s109, %s123
      %p125 = scmp.eq.s32.totalorder %s22, 0
      %p126 = por %p124, %p125
      %s128 = sadd.s32 %s127, 1
      %p131 = scmp.eq.s32.totalorder %s16, 1
      %p132 = scmp.ne.s32.totalorder %s127, %s129
      %p133 = scmp.eq.s32.totalorder %s16, 0
      %p134 = por %p132, %p133
      %p135 = scmp.ne.s32.totalorder %s127, %s129
      %p136 = scmp.eq.s32.totalorder %s21, 1
      %p137 = por %p135, %p136
      %p138 = scmp.ne.s32.totalorder %s129, %s130
      %p139 = scmp.eq.s32.totalorder %s21, 0
      %p140 = por %p138, %p139
      %p141 = scmp.ne.s32.totalorder %s129, %s130
      %p142 = scmp.eq.s32.totalorder %s22, 1
      %p143 = por %p141, %p142
      %p145 = scmp.ne.s32.totalorder %s130, %s144
      %p146 = scmp.eq.s32.totalorder %s22, 0
      %p147 = por %p145, %p146
      %s149 = sadd.s32 %s148, 1
      %p152 = scmp.eq.s32.totalorder %s16, 1
      %p153 = scmp.ne.s32.totalorder %s148, %s150
      %p154 = scmp.eq.s32.totalorder %s16, 0
      %p155 = por %p153, %p154
      %p156 = scmp.ne.s32.totalorder %s148, %s150
      %p157 = scmp.eq.s32.totalorder %s21, 1
      %p158 = por %p156, %p157
      %p159 = scmp.ne.s32.totalorder %s150, %s151
      %p160 = scmp.eq.s32.totalorder %s21, 0
      %p161 = por %p159, %p160
      %p162 = scmp.ne.s32.totalorder %s150, %s151
      %p163 = scmp.eq.s32.totalorder %s22, 1
      %p164 = por %p162, %p163
      %p166 = scmp.ne.s32.totalorder %s151, %s165
      %p167 = scmp.eq.s32.totalorder %s22, 0
      %p168 = por %p166, %p167
      %s170 = sadd.s32 %s169, 1
      %p173 = scmp.eq.s32.totalorder %s16, 1
      %p174 = scmp.ne.s32.totalorder %s169, %s171
      %p175 = scmp.eq.s32.totalorder %s16, 0
      %p176 = por %p174, %p175
      %p177 = scmp.ne.s32.totalorder %s169, %s171
      %p178 = scmp.eq.s32.totalorder %s21, 1
      %p179 = por %p177, %p178
      %p180 = scmp.ne.s32.totalorder %s171, %s172
      %p181 = scmp.eq.s32.totalorder %s21, 0
      %p182 = por %p180, %p181
      %p183 = scmp.ne.s32.totalorder %s171, %s172
      %p184 = scmp.eq.s32.totalorder %s22, 1
      %p185 = por %p183, %p184
      %p187 = scmp.ne.s32.totalorder %s172, %s186
      %p188 = scmp.eq.s32.totalorder %s22, 0
      %p189 = por %p187, %p188
      %s190 = ssub.s32 %s23, %s35
      %s191 = ssub.s32 %s24, %s31
      %s192 = sor.u32 %s190, %s191
      %p193 = scmp.eq.s32.totalorder %s192, 0
      %s195 = sadd.s32 %s194, 1
      %s196 = scalar_select %p193, %s194, %s195
      %p199 = pneg %p193
      %p200 = scmp.eq.s32.totalorder %s16, 1
      %p201 = por %p199, %p200
      %p202 = scmp.ne.s32.totalorder %s194, %s197
      %p203 = scmp.eq.s32.totalorder %s16, 0
      %p204 = por %p202, %p203
      %p205 = scmp.ne.s32.totalorder %s194, %s197
      %p206 = scmp.eq.s32.totalorder %s21, 1
      %p207 = por %p205, %p206
      %p208 = scmp.ne.s32.totalorder %s197, %s198
      %p209 = scmp.eq.s32.totalorder %s21, 0
      %p210 = por %p208, %p209
      %p211 = scmp.ne.s32.totalorder %s197, %s198
      %p212 = scmp.eq.s32.totalorder %s22, 1
      %p213 = por %p211, %p212
      %p215 = scmp.ne.s32.totalorder %s198, %s214
      %p216 = scmp.eq.s32.totalorder %s22, 0
      %p217 = por %p215, %p216
      %p218 = scmp.le.s32.totalorder 1, %s16
      %p219 = scmp.lt.s32.totalorder %s16, 3
      %p220 = pnand %p218, %p219
      %p221 = pneg %p220
      // Predicated region
      $region9: #{tpu_custom_call.1} parent=5 // pred_check
        _
      $region10: #{tpu_custom_call.1} parent=5 // pred_check_branch
        %223 = sbr.rel (%p220) target = $region12
      $region11: #{tpu_custom_call.1} parent=5 // pred_region
        %s224 = ssub.s32 %s16, 1
        // Predicated region
        $region13: #{tpu_custom_call.1} parent=11 // pred_check
          %p225 = pneg %p77
        $region14: #{tpu_custom_call.1} parent=11 // pred_check_branch
          %227 = sbr.rel (%p225) target = $region16
        $region15: #{tpu_custom_call.1} parent=11 // pred_region
          _
        $region16: #{tpu_custom_call.1} parent=11 // pred_fallthru
          _
        // Predicated region
        $region17: #{tpu_custom_call.1} parent=11 // pred_check
          %p228 = pneg %p98
        $region18: #{tpu_custom_call.1} parent=11 // pred_check_branch
          %230 = sbr.rel (%p228) target = $region20
        $region19: #{tpu_custom_call.1} parent=11 // pred_region
          _
        $region20: #{tpu_custom_call.1} parent=11 // pred_fallthru
          _
        // Predicated region
        $region21: #{tpu_custom_call.1} parent=11 // pred_check
          %p231 = pneg %p119
        $region22: #{tpu_custom_call.1} parent=11 // pred_check_branch
          %233 = sbr.rel (%p231) target = $region24
        $region23: #{tpu_custom_call.1} parent=11 // pred_region
          _
        $region24: #{tpu_custom_call.1} parent=11 // pred_fallthru
          _
        // Predicated region
        $region25: #{tpu_custom_call.1} parent=11 // pred_check
          %p234 = pneg %p140
        $region26: #{tpu_custom_call.1} parent=11 // pred_check_branch
          %236 = sbr.rel (%p234) target = $region28
        $region27: #{tpu_custom_call.1} parent=11 // pred_region
          _
        $region28: #{tpu_custom_call.1} parent=11 // pred_fallthru
          _
        // Predicated region
        $region29: #{tpu_custom_call.1} parent=11 // pred_check
          %p237 = pneg %p161
        $region30: #{tpu_custom_call.1} parent=11 // pred_check_branch
          %239 = sbr.rel (%p237) target = $region32
        $region31: #{tpu_custom_call.1} parent=11 // pred_region
          _
        $region32: #{tpu_custom_call.1} parent=11 // pred_fallthru
          _
        // Predicated region
        $region33: #{tpu_custom_call.1} parent=11 // pred_check
          %p240 = pneg %p182
        $region34: #{tpu_custom_call.1} parent=11 // pred_check_branch
          %242 = sbr.rel (%p240) target = $region36
        $region35: #{tpu_custom_call.1} parent=11 // pred_region
          _
        $region36: #{tpu_custom_call.1} parent=11 // pred_fallthru
          _
      $region12: #{tpu_custom_call.1} parent=5 // pred_fallthru
        _
      %p243 = scmp.lt.s32.totalorder %s16, 2
      // Predicated region
      $region37: #{tpu_custom_call.1} parent=5 // pred_check
        %p244 = pneg %p243
      $region38: #{tpu_custom_call.1} parent=5 // pred_check_branch
        %246 = sbr.rel (%p244) target = $region40
      $region39: #{tpu_custom_call.1} parent=5 // pred_region
        // Predicated region
        $region41: #{tpu_custom_call.1} parent=39 // pred_check
          %p247 = pneg %p50
        $region42: #{tpu_custom_call.1} parent=39 // pred_check_branch
          %249 = sbr.rel (%p247) target = $region44
        $region43: #{tpu_custom_call.1} parent=39 // pred_region
          %s250 = smul.u32 2, %s24
          %p251 = scmp.lt.s32.totalorder %s23, 1
          %s252 = scalar_select %p251, %s23, 1
          %p253 = scmp.lt.s32.totalorder %s250, 1
          %s254 = scalar_select %p253, %s250, 1
          %s255 = smul.addr %s252, 8
          %s256 = sadd.s32 %s254, %s255
          %s257 = smul.addr %s256, 8
          %s258 = scalar_lea.vmem %s0, %s257
          %s259 = smul.u32 2, %s24
        $region44: #{tpu_custom_call.1} parent=39 // pred_fallthru
          _
      $region40: #{tpu_custom_call.1} parent=5 // pred_fallthru
        _
      %p260 = scmp.le.s32.totalorder 1, %s16
      %p261 = scmp.lt.s32.totalorder %s16, 3
      %p262 = pnand %p260, %p261
      %p263 = pneg %p262
      // Predicated region
      $region45: #{tpu_custom_call.1} parent=5 // pred_check
        _
      $region46: #{tpu_custom_call.1} parent=5 // pred_check_branch
        %265 = sbr.rel (%p262) target = $region48
      $region47: #{tpu_custom_call.1} parent=5 // pred_region
        %s266 = ssub.s32 %s16, 1
        %s267 = smul.u32 2, %s26
        %p268 = scmp.lt.s32.totalorder %s25, 1
        %s269 = scalar_select %p268, %s25, 1
        %p270 = scmp.lt.s32.totalorder %s267, 1
        %s271 = scalar_select %p270, %s267, 1
        %s272 = smul.addr %s269, 8
        %s273 = sadd.s32 %s271, %s272
        %s274 = smul.addr %s273, 8
        %s275 = scalar_lea.vmem %s0, %s274
        %p276 = pneg %p56
        %p277 = pneg %p53
        %p278 = pneg %p77
        %p279 = pneg %p74
        %p280 = pneg %p98
        %p281 = pneg %p95
        %p282 = pneg %p119
        %p283 = pneg %p116
        %p284 = pneg %p140
        %p285 = pneg %p137
        %p286 = pneg %p161
        %p287 = pneg %p158
        %p288 = pneg %p182
        %p289 = pneg %p179
        %p290 = pneg %p210
        %p291 = pneg %p207
        %s292 = sand.u32 %s197, 1
        %s293 = scalar_lea.sflag [#allocation3], %s292
        %s294 = sand.u32 %s197, 1
        %s295 = smul.addr %s294, 64
        %s296 = scalar_lea.vmem [#allocation2], %s295
        %s297 = smul.u32 2, %s26
        %p298 = scmp.lt.s32.totalorder %s25, 1
        %s299 = scalar_select %p298, %s25, 1
        %p300 = scmp.lt.s32.totalorder %s297, 1
        %s301 = scalar_select %p300, %s297, 1
        %s302 = smul.addr %s299, 8
        %s303 = sadd.s32 %s301, %s302
        %s304 = smul.addr %s303, 8
        %s305 = scalar_lea.vmem %s0, %s304
        %s306 = smul.u32 2, %s26
        %s307 = smul.u32 2, %s26
        %v309 = vld [vmem:[%s305] sm:$0xff]
        %v310 = vld [vmem:[%s305 + $0x8] sm:$0xff]
        %v311 = vld [vmem:[%s305 + $0x10] sm:$0xff]
        %v312 = vld [vmem:[%s305 + $0x18] sm:$0xff]
        %v313 = vld [vmem:[%s305 + $0x20] sm:$0xff]
        %v314 = vld [vmem:[%s305 + $0x28] sm:$0xff]
        %v315 = vld [vmem:[%s305 + $0x30] sm:$0xff]
        %v316 = vld [vmem:[%s305 + $0x38] sm:$0xff]
        %v317 = vpack.c.bf16 %v311, %v309
        %v318 = vpack.c.bf16 %v312, %v310
        %v319 = vpack.c.bf16 %v315, %v313
        %v320 = vpack.c.bf16 %v316, %v314
        %v321 = vld [vmem:[%s1] sm:$0xf]
        %v322 = vld [vmem:[%s1 + $0x4] sm:$0xf]
        %v323 = vld [vmem:[%s1 + $0x8] sm:$0xf]
        %v324 = vld [vmem:[%s1 + $0xc] sm:$0xf]
        %v325 = vld [vmem:[%s1 + $0x10] sm:$0xf]
        %v326 = vld [vmem:[%s1 + $0x14] sm:$0xf]
        %v327 = vld [vmem:[%s1 + $0x18] sm:$0xf]
        %v328 = vld [vmem:[%s1 + $0x1c] sm:$0xf]
        %v329 = vld [vmem:[%s1 + $0x20] sm:$0xf]
        %v330 = vld [vmem:[%s2] sm:$0xff]
        %v331 = vld [vmem:[%s2 + $0x8] sm:$0xff]
        %v332 = vld [vmem:[%s2 + $0x10] sm:$0xff]
        %v333 = vld [vmem:[%s2 + $0x18] sm:$0xff]
        %v334 = vld [vmem:[%s2 + $0x20] sm:$0xff]
        %v335 = vld [vmem:[%s2 + $0x28] sm:$0xff]
        %v336 = vld [vmem:[%s2 + $0x30] sm:$0xff]
        %v337 = vld [vmem:[%s2 + $0x38] sm:$0xff]
        %v338 = vld [vmem:[%s2 + $0x40] sm:$0xff]
        %340 = vset.pattern.permute.xlu0 0
        %341 = vperm.xlu0 %340, %v330
        %v342 = vpop.permute.xlu0 %341
        %345 = vset.pattern.permute.xlu0 0
        %346 = vperm.xlu0 %345, %v331
        %v347 = vpop.permute.xlu0 %346
        %350 = vset.pattern.permute.xlu0 0
        %351 = vperm.xlu0 %350, %v332
        %v352 = vpop.permute.xlu0 %351
        %355 = vset.pattern.permute.xlu0 0
        %356 = vperm.xlu0 %355, %v333
        %v357 = vpop.permute.xlu0 %356
        %360 = vset.pattern.permute.xlu0 0
        %361 = vperm.xlu0 %360, %v334
        %v362 = vpop.permute.xlu0 %361
        %365 = vset.pattern.permute.xlu0 0
        %366 = vperm.xlu0 %365, %v335
        %v367 = vpop.permute.xlu0 %366
        %370 = vset.pattern.permute.xlu0 0
        %371 = vperm.xlu0 %370, %v336
        %v372 = vpop.permute.xlu0 %371
        %375 = vset.pattern.permute.xlu0 0
        %376 = vperm.xlu0 %375, %v337
        %v377 = vpop.permute.xlu0 %376
        %380 = vset.pattern.permute.xlu0 0
        %381 = vperm.xlu0 %380, %v338
        %v382 = vpop.permute.xlu0 %381
        %v393 = vunpack.c.l.b16 %v321
        %v394 = vunpack.c.l.b16 %v322
        %v395 = vunpack.c.l.b16 %v323
        %v396 = vunpack.c.l.b16 %v324
        %v397 = vunpack.c.l.b16 %v325
        %v398 = vunpack.c.l.b16 %v326
        %v399 = vunpack.c.l.b16 %v327
        %v400 = vunpack.c.l.b16 %v328
        %v401 = vunpack.c.l.b16 %v329
        %v402 = vpack.c.b16 %v394, %v393
        %v403 = vpack.c.b16 %v396, %v395
        %v404 = vpack.c.b16 %v398, %v397
        %v405 = vpack.c.b16 %v400, %v399
        %v406 = vpack.c.b16 %v401, %v401
        %vm407 = vcmask 261120
        %v409 = vsel %vm407, %v402, 0
        %v412 = vsel %vm407, %v403, 0
        %v415 = vsel %vm407, %v404, 0
        %v418 = vsel %vm407, %v405, 0
        %v421 = vsel %vm407, %v406, 0
        %423 = vmatprep.subr.bf16.mxu0 %v318
        %424 = vmatpush1.bf16.msra.mxu0 %v317
        %425 = vmatprep.subr.bf16.mxu0 %v320
        %426 = vmatpush1.bf16.msra.mxu0 %v319
        %427 = vmatprep.subr.bf16.mxu0 0
        %428 = vmatpush1.bf16.msra.mxu0 0
        %429 = vmatprep.subr.bf16.mxu0 0
        %430 = vmatpush1.bf16.msra.mxu0 0
        %431 = vmatprep.subr.bf16.mxu0 0
        %432 = vmatpush1.bf16.msra.mxu0 0
        %433 = vmatprep.subr.bf16.mxu0 0
        %434 = vmatpush1.bf16.msra.mxu0 0
        %435 = vmatprep.subr.bf16.mxu0 0
        %436 = vmatpush1.bf16.msra.mxu0 0
        %437 = vmatprep.subr.bf16.mxu0 0
        %438 = vmatpush1.bf16.msra.mxu0 0
        %439 = vmatprep.subr.bf16.mxu0 0
        %440 = vmatpush1.bf16.msra.mxu0 0
        %441 = vmatprep.subr.bf16.mxu0 0
        %442 = vmatpush1.bf16.msra.mxu0 0
        %443 = vmatprep.subr.bf16.mxu0 0
        %444 = vmatpush1.bf16.msra.mxu0 0
        %445 = vmatprep.subr.bf16.mxu0 0
        %446 = vmatpush1.bf16.msra.mxu0 0
        %447 = vmatprep.subr.bf16.mxu0 0
        %448 = vmatpush1.bf16.msra.mxu0 0
        %449 = vmatprep.subr.bf16.mxu0 0
        %450 = vmatpush1.bf16.msra.mxu0 0
        %451 = vmatprep.subr.bf16.mxu0 0
        %452 = vmatpush1.bf16.msra.mxu0 0
        %453 = vmatprep.subr.bf16.mxu0 0
        %454 = vmatpush1.bf16.msra.mxu0 0
        %455 = vmatprep.mubr.bf16.mxu0 0
        %456 = vmatmul.mubr.bf16.gmra.mrb[0].mxu0 %v409
        %v457 = vpop.f32.mrb[0].mxu0
        %v458 = vadd.f32 %v342, %v457
        %v459 = vpop.f32.mrb[0].mxu0
        %v460 = vadd.f32 %v342, %v459
        %v461 = vpop.f32.mrb[0].mxu0
        %v462 = vadd.f32 %v347, %v461
        %v463 = vpop.f32.mrb[0].mxu0
        %v464 = vadd.f32 %v347, %v463
        %465 = vmatprep.mubr.bf16.mxu0 0
        %466 = vmatmul.mubr.bf16.gmra.mrb[0].mxu0 %v412
        %v467 = vpop.f32.mrb[0].mxu0
        %v468 = vadd.f32 %v352, %v467
        %v469 = vpop.f32.mrb[0].mxu0
        %v470 = vadd.f32 %v352, %v469
        %v471 = vpop.f32.mrb[0].mxu0
        %v472 = vadd.f32 %v357, %v471
        %v473 = vpop.f32.mrb[0].mxu0
        %v474 = vadd.f32 %v357, %v473
        %475 = vmatprep.mubr.bf16.mxu0 0
        %476 = vmatmul.mubr.bf16.gmra.mrb[0].mxu0 %v415
        %v477 = vpop.f32.mrb[0].mxu0
        %v478 = vadd.f32 %v362, %v477
        %v479 = vpop.f32.mrb[0].mxu0
        %v480 = vadd.f32 %v362, %v479
        %v481 = vpop.f32.mrb[0].mxu0
        %v482 = vadd.f32 %v367, %v481
        %v483 = vpop.f32.mrb[0].mxu0
        %v484 = vadd.f32 %v367, %v483
        %485 = vmatprep.mubr.bf16.mxu0 0
        %486 = vmatmul.mubr.bf16.gmra.mrb[0].mxu0 %v418
        %v487 = vpop.f32.mrb[0].mxu0
        %v488 = vadd.f32 %v372, %v487
        %v489 = vpop.f32.mrb[0].mxu0
        %v490 = vadd.f32 %v372, %v489
        %v491 = vpop.f32.mrb[0].mxu0
        %v492 = vadd.f32 %v377, %v491
        %v493 = vpop.f32.mrb[0].mxu0
        %v494 = vadd.f32 %v377, %v493
        %495 = vmatprep.mubr.bf16.mxu0 0
        %496 = vmatmul.mubr.bf16.gmra.mrb[0].mxu0 %v421
        %v497 = vpop.f32.mrb[0].mxu0
        %v498 = vadd.f32 %v382, %v497
        %v499 = vpop.f32.mrb[0].mxu0
        %v500 = vadd.f32 %v382, %v499
        %v501 = vpop.f32.mrb[0].mxu0
        %v502 = vpop.f32.mrb[0].mxu0
        %503 = vdwg.mxu0
        %v504 = vmax.f32 %v458, 0.0
        %v505 = vmax.f32 %v460, 0.0
        %v506 = vmax.f32 %v462, 0.0
        %v507 = vmax.f32 %v464, 0.0
        %v508 = vmax.f32 %v468, 0.0
        %v509 = vmax.f32 %v470, 0.0
        %v510 = vmax.f32 %v472, 0.0
        %v511 = vmax.f32 %v474, 0.0
        %v512 = vmax.f32 %v478, 0.0
        %v513 = vmax.f32 %v480, 0.0
        %v514 = vmax.f32 %v482, 0.0
        %v515 = vmax.f32 %v484, 0.0
        %v516 = vmax.f32 %v488, 0.0
        %v517 = vmax.f32 %v490, 0.0
        %v518 = vmax.f32 %v492, 0.0
        %v519 = vmax.f32 %v494, 0.0
        %v520 = vmax.f32 %v498, 0.0
        %v521 = vmax.f32 %v500, 0.0
        %v522 = vld [vmem:[%s3] sm:$0xf]
        %v523 = vld [vmem:[%s3 + $0x4] sm:$0xf]
        %v524 = vld [vmem:[%s3 + $0x8] sm:$0xf]
        %v525 = vld [vmem:[%s3 + $0xc] sm:$0xf]
        %v526 = vpack.c.bf16 %v506, %v504
        %v527 = vpack.c.bf16 %v507, %v505
        %v528 = vpack.c.bf16 %v510, %v508
        %v529 = vpack.c.bf16 %v511, %v509
        %v530 = vpack.c.bf16 %v514, %v512
        %v531 = vpack.c.bf16 %v515, %v513
        %v532 = vpack.c.bf16 %v518, %v516
        %v533 = vpack.c.bf16 %v519, %v517
        %v534 = vld [vmem:[%s4] sm:$0xff]
        %v535 = vld [vmem:[%s4 + $0x8] sm:$0xff]
        %v536 = vld [vmem:[%s4 + $0x10] sm:$0xff]
        %v537 = vld [vmem:[%s4 + $0x18] sm:$0xff]
        %539 = vset.pattern.permute.xlu0 0
        %540 = vperm.xlu0 %539, %v534
        %v541 = vpop.permute.xlu0 %540
        %544 = vset.pattern.permute.xlu0 0
        %545 = vperm.xlu0 %544, %v535
        %v546 = vpop.permute.xlu0 %545
        %549 = vset.pattern.permute.xlu0 0
        %550 = vperm.xlu0 %549, %v536
        %v551 = vpop.permute.xlu0 %550
        %554 = vset.pattern.permute.xlu0 0
        %555 = vperm.xlu0 %554, %v537
        %v556 = vpop.permute.xlu0 %555
        %v562 = vunpack.c.l.b16 %v522
        %v563 = vunpack.c.l.b16 %v523
        %v564 = vunpack.c.l.b16 %v524
        %v565 = vunpack.c.l.b16 %v525
        %v566 = vpack.c.b16 %v563, %v562
        %v567 = vpack.c.b16 %v565, %v564
        %vm568 = vcmask 523264
        %v570 = vsel %vm568, %v566, 0
        %v573 = vsel %vm568, %v567, 0
        %575 = vmatprep.subr.bf16.mxu0 %v527
        %576 = vmatpush1.bf16.msra.mxu0 %v526
        %577 = vmatprep.subr.bf16.mxu0 %v529
        %578 = vmatpush1.bf16.msra.mxu0 %v528
        %579 = vmatprep.subr.bf16.mxu0 %v531
        %580 = vmatpush1.bf16.msra.mxu0 %v530
        %581 = vmatprep.subr.bf16.mxu0 %v533
        %582 = vmatpush1.bf16.msra.mxu0 %v532
        %583 = vmatprep.subr.bf16.mxu0 0
        %584 = vmatpush1.bf16.msra.mxu0 0
        %585 = vmatprep.subr.bf16.mxu0 0
        %586 = vmatpush1.bf16.msra.mxu0 0
        %587 = vmatprep.subr.bf16.mxu0 0
        %588 = vmatpush1.bf16.msra.mxu0 0
        %589 = vmatprep.subr.bf16.mxu0 0
        %590 = vmatpush1.bf16.msra.mxu0 0
        %591 = vmatprep.subr.bf16.mxu0 0
        %592 = vmatpush1.bf16.msra.mxu0 0
        %593 = vmatprep.subr.bf16.mxu0 0
        %594 = vmatpush1.bf16.msra.mxu0 0
        %595 = vmatprep.subr.bf16.mxu0 0
        %596 = vmatpush1.bf16.msra.mxu0 0
        %597 = vmatprep.subr.bf16.mxu0 0
        %598 = vmatpush1.bf16.msra.mxu0 0
        %599 = vmatprep.subr.bf16.mxu0 0
        %600 = vmatpush1.bf16.msra.mxu0 0
        %601 = vmatprep.subr.bf16.mxu0 0
        %602 = vmatpush1.bf16.msra.mxu0 0
        %603 = vmatprep.subr.bf16.mxu0 0
        %604 = vmatpush1.bf16.msra.mxu0 0
        %605 = vmatprep.subr.bf16.mxu0 0
        %606 = vmatpush1.bf16.msra.mxu0 0
        %607 = vmatprep.mubr.bf16.mxu0 0
        %608 = vmatmul.mubr.bf16.gmra.mrb[0].mxu0 %v570
        %v609 = vpop.f32.mrb[0].mxu0
        %v610 = vadd.f32 %v541, %v609
        %v611 = vpop.f32.mrb[0].mxu0
        %v612 = vadd.f32 %v541, %v611
        %v613 = vpop.f32.mrb[0].mxu0
        %v614 = vadd.f32 %v546, %v613
        %v615 = vpop.f32.mrb[0].mxu0
        %v616 = vadd.f32 %v546, %v615
        %617 = vmatprep.mubr.bf16.mxu0 0
        %618 = vmatmul.mubr.bf16.gmra.mrb[0].mxu0 %v573
        %v619 = vpop.f32.mrb[0].mxu0
        %v620 = vadd.f32 %v551, %v619
        %v621 = vpop.f32.mrb[0].mxu0
        %v622 = vadd.f32 %v551, %v621
        %v623 = vpop.f32.mrb[0].mxu0
        %v624 = vadd.f32 %v556, %v623
        %v625 = vpop.f32.mrb[0].mxu0
        %v626 = vadd.f32 %v556, %v625
        %627 = vdwg.mxu0
        %v628 = vld [vmem:[%s5] sm:$0xf]
        %v629 = vld [vmem:[%s5 + $0x4] sm:$0xf]
        %v630 = vld [vmem:[%s5 + $0x8] sm:$0xf]
        %v631 = vld [vmem:[%s5 + $0xc] sm:$0xf]
        %v632 = vpack.c.bf16 %v520, %v520
        %v633 = vpack.c.bf16 %v521, %v521
        %v634 = vld [vmem:[%s6] sm:$0xff]
        %v635 = vld [vmem:[%s6 + $0x8] sm:$0xff]
        %v636 = vld [vmem:[%s6 + $0x10] sm:$0xff]
        %v637 = vld [vmem:[%s6 + $0x18] sm:$0xff]
        %639 = vset.pattern.permute.xlu0 0
        %640 = vperm.xlu0 %639, %v634
        %v641 = vpop.permute.xlu0 %640
        %644 = vset.pattern.permute.xlu0 0
        %645 = vperm.xlu0 %644, %v635
        %v646 = vpop.permute.xlu0 %645
        %649 = vset.pattern.permute.xlu0 0
        %650 = vperm.xlu0 %649, %v636
        %v651 = vpop.permute.xlu0 %650
        %654 = vset.pattern.permute.xlu0 0
        %655 = vperm.xlu0 %654, %v637
        %v656 = vpop.permute.xlu0 %655
        %v662 = vunpack.c.l.b16 %v628
        %v663 = vunpack.c.l.b16 %v629
        %v664 = vunpack.c.l.b16 %v630
        %v665 = vunpack.c.l.b16 %v631
        %v666 = vpack.c.b16 %v663, %v662
        %v667 = vpack.c.b16 %v665, %v664
        %vm668 = vcmask 64512
        %v670 = vsel %vm668, %v666, 0
        %v673 = vsel %vm668, %v667, 0
        %vm675 = vcmask 1043456
        %v677 = vsel %vm675, %v632, 0
        %v680 = vsel %vm675, %v633, 0
        %682 = vmatprep.subr.bf16.mxu0 %v680
        %683 = vmatpush1.bf16.msra.mxu0 %v677
        %684 = vmatprep.subr.bf16.mxu0 0
        %685 = vmatpush1.bf16.msra.mxu0 0
        %686 = vmatprep.subr.bf16.mxu0 0
        %687 = vmatpush1.bf16.msra.mxu0 0
        %688 = vmatprep.subr.bf16.mxu0 0
        %689 = vmatpush1.bf16.msra.mxu0 0
        %690 = vmatprep.subr.bf16.mxu0 0
        %691 = vmatpush1.bf16.msra.mxu0 0
        %692 = vmatprep.subr.bf16.mxu0 0
        %693 = vmatpush1.bf16.msra.mxu0 0
        %694 = vmatprep.subr.bf16.mxu0 0
        %695 = vmatpush1.bf16.msra.mxu0 0
        %696 = vmatprep.subr.bf16.mxu0 0
        %697 = vmatpush1.bf16.msra.mxu0 0
        %698 = vmatprep.subr.bf16.mxu0 0
        %699 = vmatpush1.bf16.msra.mxu0 0
        %700 = vmatprep.subr.bf16.mxu0 0
        %701 = vmatpush1.bf16.msra.mxu0 0
        %702 = vmatprep.subr.bf16.mxu0 0
        %703 = vmatpush1.bf16.msra.mxu0 0
        %704 = vmatprep.subr.bf16.mxu0 0
        %705 = vmatpush1.bf16.msra.mxu0 0
        %706 = vmatprep.subr.bf16.mxu0 0
        %707 = vmatpush1.bf16.msra.mxu0 0
        %708 = vmatprep.subr.bf16.mxu0 0
        %709 = vmatpush1.bf16.msra.mxu0 0
        %710 = vmatprep.subr.bf16.mxu0 0
        %711 = vmatpush1.bf16.msra.mxu0 0
        %712 = vmatprep.subr.bf16.mxu0 0
        %713 = vmatpush1.bf16.msra.mxu0 0
        %714 = vmatprep.mubr.bf16.mxu0 0
        %715 = vmatmul.mubr.bf16.gmra.mrb[0].mxu0 %v670
        %v716 = vpop.f32.mrb[0].mxu0
        %v717 = vadd.f32 %v641, %v716
        %v718 = vpop.f32.mrb[0].mxu0
        %v719 = vadd.f32 %v641, %v718
        %v720 = vpop.f32.mrb[0].mxu0
        %v721 = vadd.f32 %v646, %v720
        %v722 = vpop.f32.mrb[0].mxu0
        %v723 = vadd.f32 %v646, %v722
        %724 = vmatprep.mubr.bf16.mxu0 0
        %725 = vmatmul.mubr.bf16.gmra.mrb[0].mxu0 %v673
        %v726 = vpop.f32.mrb[0].mxu0
        %v727 = vadd.f32 %v651, %v726
        %v728 = vpop.f32.mrb[0].mxu0
        %v729 = vadd.f32 %v651, %v728
        %v730 = vpop.f32.mrb[0].mxu0
        %v731 = vadd.f32 %v656, %v730
        %v732 = vpop.f32.mrb[0].mxu0
        %v733 = vadd.f32 %v656, %v732
        %734 = vdwg.mxu0
        %v735 = vxor.u32 %v717, 2147483648
        %v736 = vxor.u32 %v719, 2147483648
        %v737 = vxor.u32 %v721, 2147483648
        %v738 = vxor.u32 %v723, 2147483648
        %v739 = vxor.u32 %v727, 2147483648
        %v740 = vxor.u32 %v729, 2147483648
        %v741 = vxor.u32 %v731, 2147483648
        %v742 = vxor.u32 %v733, 2147483648
        %v743 = vmul.f32 %v735, 1.442695
        %v744 = vpow.pop %v743
        %v745 = vmul.f32 %v736, 1.442695
        %v746 = vpow.pop %v745
        %v747 = vmul.f32 %v737, 1.442695
        %v748 = vpow.pop %v747
        %v749 = vmul.f32 %v738, 1.442695
        %v750 = vpow.pop %v749
        %v751 = vmul.f32 %v739, 1.442695
        %v752 = vpow.pop %v751
        %v753 = vmul.f32 %v740, 1.442695
        %v754 = vpow.pop %v753
        %v755 = vmul.f32 %v741, 1.442695
        %v756 = vpow.pop %v755
        %v757 = vmul.f32 %v742, 1.442695
        %v758 = vpow.pop %v757
        %v759 = vadd.f32 %v744, 1.0
        %v760 = vadd.f32 %v746, 1.0
        %v761 = vadd.f32 %v748, 1.0
        %v762 = vadd.f32 %v750, 1.0
        %v763 = vadd.f32 %v752, 1.0
        %v764 = vadd.f32 %v754, 1.0
        %v765 = vadd.f32 %v756, 1.0
        %v766 = vadd.f32 %v758, 1.0
        %v767 = vrcp.pop %v759
        %v768 = vmul.f32 1.0, %v767
        %v769 = vrcp.pop %v760
        %v770 = vmul.f32 1.0, %v769
        %v771 = vrcp.pop %v761
        %v772 = vmul.f32 1.0, %v771
        %v773 = vrcp.pop %v762
        %v774 = vmul.f32 1.0, %v773
        %v775 = vrcp.pop %v763
        %v776 = vmul.f32 1.0, %v775
        %v777 = vrcp.pop %v764
        %v778 = vmul.f32 1.0, %v777
        %v779 = vrcp.pop %v765
        %v780 = vmul.f32 1.0, %v779
        %v781 = vrcp.pop %v766
        %v782 = vmul.f32 1.0, %v781
        %v783 = vsub.f32 %v309, %v610
        %v784 = vsub.f32 %v310, %v612
        %v785 = vsub.f32 %v311, %v614
        %v786 = vsub.f32 %v312, %v616
        %v787 = vsub.f32 %v313, %v620
        %v788 = vsub.f32 %v314, %v622
        %v789 = vsub.f32 %v315, %v624
        %v790 = vsub.f32 %v316, %v626
        %v791 = vmul.f32 %v768, %v783
        %v792 = vmul.f32 %v770, %v784
        %v793 = vmul.f32 %v772, %v785
        %v794 = vmul.f32 %v774, %v786
        %v795 = vmul.f32 %v776, %v787
        %v796 = vmul.f32 %v778, %v788
        %v797 = vmul.f32 %v780, %v789
        %v798 = vmul.f32 %v782, %v790
        %v799 = vadd.f32 %v610, %v791
        %v800 = vadd.f32 %v612, %v792
        %v801 = vadd.f32 %v614, %v793
        %v802 = vadd.f32 %v616, %v794
        %v803 = vadd.f32 %v620, %v795
        %v804 = vadd.f32 %v622, %v796
        %v805 = vadd.f32 %v624, %v797
        %v806 = vadd.f32 %v626, %v798
        %807 = vst [vmem:[%s296] sm:$0xff] %v799
        %808 = vst [vmem:[%s296 + $0x8] sm:$0xff] %v800
        %809 = vst [vmem:[%s296 + $0x10] sm:$0xff] %v801
        %810 = vst [vmem:[%s296 + $0x18] sm:$0xff] %v802
        %811 = vst [vmem:[%s296 + $0x20] sm:$0xff] %v803
        %812 = vst [vmem:[%s296 + $0x28] sm:$0xff] %v804
        %813 = vst [vmem:[%s296 + $0x30] sm:$0xff] %v805
        %814 = vst [vmem:[%s296 + $0x38] sm:$0xff] %v806
        %s815 = sand.u32 %s197, 1
        %s816 = scalar_lea.sflag [#allocation3], %s815
        %s817 = sand.u32 %s197, 1
        %s818 = smul.addr %s817, 64
        %s819 = scalar_lea.vmem [#allocation2], %s818
        // Predicated region
        $region49: #{tpu_custom_call.1} parent=47 // pred_check
          %p820 = pneg %p207
        $region50: #{tpu_custom_call.1} parent=47 // pred_check_branch
          %822 = sbr.rel (%p820) target = $region52
        $region51: #{tpu_custom_call.1} parent=47 // pred_region
          %s823 = smul.u32 2, %s26
          %s825 = ssub.s32 1024, 1024
          %826 = vsyncadd %s816, %s825
          %s827 = smul.addr %s25, 8
          %s828 = sadd.s32 %s823, %s827
          %s829 = smul.addr %s828, 128
          %s830 = scalar_lea.hbm %s7, %s829
          %s831 = sshll.u32 %s819, 4
          %s832 = int_to_ptr.vmem [resolvable:$true] %s831
          %837 = dma.vmem_to_hbm [thread:$0]  %s832, 1024, %s830, %s816, 256, 256, 16
        $region52: #{tpu_custom_call.1} parent=47 // pred_fallthru
          _
      $region48: #{tpu_custom_call.1} parent=5 // pred_fallthru
        _
      %p838 = scmp.le.s32.totalorder 2, %s16
      // Predicated region
      $region53: #{tpu_custom_call.1} parent=5 // pred_check
        %p839 = pneg %p838
      $region54: #{tpu_custom_call.1} parent=5 // pred_check_branch
        %841 = sbr.rel (%p839) target = $region56
      $region55: #{tpu_custom_call.1} parent=5 // pred_region
        %s842 = ssub.s32 %s16, 2
        // Predicated region
        $region57: #{tpu_custom_call.1} parent=55 // pred_check
          %p843 = pneg %p213
        $region58: #{tpu_custom_call.1} parent=55 // pred_check_branch
          %845 = sbr.rel (%p843) target = $region60
        $region59: #{tpu_custom_call.1} parent=55 // pred_region
          %s846 = sand.u32 %s198, 1
          %s847 = scalar_lea.sflag [#allocation3], %s846
          %s848 = sand.u32 %s198, 1
          %s849 = smul.addr %s848, 64
          %s850 = scalar_lea.vmem [#allocation2], %s849
          %851 = dma.done %s847, 1024
        $region60: #{tpu_custom_call.1} parent=55 // pred_fallthru
          _
      $region56: #{tpu_custom_call.1} parent=5 // pred_fallthru
        _
    $region6: #{tpu_custom_call.1} parent=1 // loop_footer
      %s20 = sadd.s32 1, %s16
    $region7: #{tpu_custom_call.1} parent=1 // loop_footer_branch
      %15 = sbr.rel target = $region3
    $region8: #{tpu_custom_call.1} parent=1 // loop_exit
      _
    %852 = vsyncpa [#allocation3], 1
    %s853 = scalar_lea.sflag [#allocation3], 1
    %854 = vsyncpa %s853, 1

// kernel: tpu_custom_call.1
$region0: #{tpu_custom_call.1}
  #allocation0 [shape = 'u32[]', space=smem, size = 0x4, offset = 0x4, fixed_abs, tag = 'smem constant byte address 0x4 - core index']
  #allocation1 [shape = 'u32[144,128]{1,0:T(1,128)}', space=vmem, size = 0x12000, scoped, tag = 'internal scratch']
  %s0 = inlined_call_operand.vmem [shape: f32[2,32,256], index: 0, kind: input, shape index: {}]
  %s1 = inlined_call_operand.vmem [shape: bf16[72,32], index: 1, kind: input, shape index: {}]
  %s2 = inlined_call_operand.vmem [shape: f32[72,1], index: 2, kind: input, shape index: {}]
  %s3 = inlined_call_operand.vmem [shape: bf16[32,64], index: 3, kind: input, shape index: {}]
  %s4 = inlined_call_operand.vmem [shape: f32[32,1], index: 4, kind: input, shape index: {}]
  %s5 = inlined_call_operand.vmem [shape: bf16[32,8], index: 5, kind: input, shape index: {}]
  %s6 = inlined_call_operand.vmem [shape: f32[32,1], index: 6, kind: input, shape index: {}]
  %s7 = inlined_call_operand.hbm [shape: f32[2,32,256], index: 7, kind: output, shape index: {}]
  %s8 = sld [smem:[#allocation0]]
  $region61: #{tpu_custom_call.1} parent=0
    _
  %s10 = ssub.s32 1, %s8
  %s11 = scalar_select 0, %s10, %s8
  $region1: #{tpu_custom_call.1} parent=0
    #allocation2 [shape = 'u8[65536]{0}', space=vmem, size = 0x10000, scoped, tag = 'output window, operand 0']
    #allocation3 [shape = 's32[2]{0}', space=sflag, size = 0x8, scoped, tag = 'scoped memory for tpu_custom_call.1']
    %12 = vsyncpa [#allocation3], 0
    %s13 = scalar_lea.sflag [#allocation3], 1
    %14 = vsyncpa %s13, 0
    loop: start=0, step=1, limit=4
    $region2: #{tpu_custom_call.1} parent=1 // loop_pre_header
      _
    $region3: #{tpu_custom_call.1} parent=1 // loop_header
      %s16 = sphi 0, %s20
      %p17 = scmp.ge.s32.totalorder %s16, 4
      %s23 = sphi 0, %s35
      %s24 = sphi 0, %s31
      %s25 = sphi 0, %s23
      %s26 = sphi 0, %s24
      %s27 = sphi 0, %s25
      %s28 = sphi 0, %s26
      %s40 = sphi 0, %s42
      %s43 = sphi 0, %s40
      %s44 = sphi 0, %s43
      %s60 = sphi 0, %s44
      %s64 = sphi 0, %s64
      %s66 = sphi 0, %s64
      %s67 = sphi 0, %s66
      %s81 = sphi 0, %s67
      %s85 = sphi 0, %s85
      %s87 = sphi 0, %s85
      %s88 = sphi 0, %s87
      %s102 = sphi 0, %s88
      %s106 = sphi 0, %s106
      %s108 = sphi 0, %s106
      %s109 = sphi 0, %s108
      %s123 = sphi 0, %s109
      %s127 = sphi 0, %s127
      %s129 = sphi 0, %s127
      %s130 = sphi 0, %s129
      %s144 = sphi 0, %s130
      %s148 = sphi 0, %s148
      %s150 = sphi 0, %s148
      %s151 = sphi 0, %s150
      %s165 = sphi 0, %s151
      %s169 = sphi 0, %s169
      %s171 = sphi 0, %s169
      %s172 = sphi 0, %s171
      %s186 = sphi 0, %s172
      %s194 = sphi 0, %s196
      %s197 = sphi 0, %s194
      %s198 = sphi 0, %s197
      %s214 = sphi 0, %s198
    $region4: #{tpu_custom_call.1} parent=1 // loop_header_branch
      %19 = sbr.rel (%p17) target = $region8
    $region5: #{tpu_custom_call.1} parent=1 // loop_body
      %s21 = ssub.s32 %s16, 1
      %s22 = ssub.s32 %s16, 2
      %s29 = sadd.s32 1, %s24
      %p30 = scmp.ge.s32.totalorder %s29, 1
      %s31 = scalar_select %p30, 0, %s29
      %s32 = sadd.s32 1, %s23
      %s33 = scalar_select %p30, %s32, %s23
      %p34 = scmp.ge.s32.totalorder %s33, 2
      %s35 = scalar_select %p34, 0, %s33
      %s36 = ssub.s32 %s23, %s35
      %s37 = ssub.s32 %s24, %s31
      %s38 = sor.u32 %s36, %s37
      %p39 = scmp.eq.s32.totalorder %s38, 0
      %s41 = sadd.s32 %s40, 1
      %s42 = scalar_select %p39, %s40, %s41
      %p45 = pneg %p39
      %p46 = scmp.eq.s32.totalorder %s16, 1
      %p47 = por %p45, %p46
      %p48 = scmp.ne.s32.totalorder %s40, %s43
      %p49 = scmp.eq.s32.totalorder %s16, 0
      %p50 = por %p48, %p49
      %p51 = scmp.ne.s32.totalorder %s40, %s43
      %p52 = scmp.eq.s32.totalorder %s21, 1
      %p53 = por %p51, %p52
      %p54 = scmp.ne.s32.totalorder %s43, %s44
      %p55 = scmp.eq.s32.totalorder %s21, 0
      %p56 = por %p54, %p55
      %p57 = scmp.ne.s32.totalorder %s43, %s44
      %p58 = scmp.eq.s32.totalorder %s22, 1
      %p59 = por %p57, %p58
      %p61 = scmp.ne.s32.totalorder %s44, %s60
      %p62 = scmp.eq.s32.totalorder %s22, 0
      %p63 = por %p61, %p62
      %s65 = sadd.s32 %s64, 1
      %p68 = scmp.eq.s32.totalorder %s16, 1
      %p69 = scmp.ne.s32.totalorder %s64, %s66
      %p70 = scmp.eq.s32.totalorder %s16, 0
      %p71 = por %p69, %p70
      %p72 = scmp.ne.s32.totalorder %s64, %s66
      %p73 = scmp.eq.s32.totalorder %s21, 1
      %p74 = por %p72, %p73
      %p75 = scmp.ne.s32.totalorder %s66, %s67
      %p76 = scmp.eq.s32.totalorder %s21, 0
      %p77 = por %p75, %p76
      %p78 = scmp.ne.s32.totalorder %s66, %s67
      %p79 = scmp.eq.s32.totalorder %s22, 1
      %p80 = por %p78, %p79
      %p82 = scmp.ne.s32.totalorder %s67, %s81
      %p83 = scmp.eq.s32.totalorder %s22, 0
      %p84 = por %p82, %p83
      %s86 = sadd.s32 %s85, 1
      %p89 = scmp.eq.s32.totalorder %s16, 1
      %p90 = scmp.ne.s32.totalorder %s85, %s87
      %p91 = scmp.eq.s32.totalorder %s16, 0
      %p92 = por %p90, %p91
      %p93 = scmp.ne.s32.totalorder %s85, %s87
      %p94 = scmp.eq.s32.totalorder %s21, 1
      %p95 = por %p93, %p94
      %p96 = scmp.ne.s32.totalorder %s87, %s88
      %p97 = scmp.eq.s32.totalorder %s21, 0
      %p98 = por %p96, %p97
      %p99 = scmp.ne.s32.totalorder %s87, %s88
      %p100 = scmp.eq.s32.totalorder %s22, 1
      %p101 = por %p99, %p100
      %p103 = scmp.ne.s32.totalorder %s88, %s102
      %p104 = scmp.eq.s32.totalorder %s22, 0
      %p105 = por %p103, %p104
      %s107 = sadd.s32 %s106, 1
      %p110 = scmp.eq.s32.totalorder %s16, 1
      %p111 = scmp.ne.s32.totalorder %s106, %s108
      %p112 = scmp.eq.s32.totalorder %s16, 0
      %p113 = por %p111, %p112
      %p114 = scmp.ne.s32.totalorder %s106, %s108
      %p115 = scmp.eq.s32.totalorder %s21, 1
      %p116 = por %p114, %p115
      %p117 = scmp.ne.s32.totalorder %s108, %s109
      %p118 = scmp.eq.s32.totalorder %s21, 0
      %p119 = por %p117, %p118
      %p120 = scmp.ne.s32.totalorder %s108, %s109
      %p121 = scmp.eq.s32.totalorder %s22, 1
      %p122 = por %p120, %p121
      %p124 = scmp.ne.s32.totalorder %s109, %s123
      %p125 = scmp.eq.s32.totalorder %s22, 0
      %p126 = por %p124, %p125
      %s128 = sadd.s32 %s127, 1
      %p131 = scmp.eq.s32.totalorder %s16, 1
      %p132 = scmp.ne.s32.totalorder %s127, %s129
      %p133 = scmp.eq.s32.totalorder %s16, 0
      %p134 = por %p132, %p133
      %p135 = scmp.ne.s32.totalorder %s127, %s129
      %p136 = scmp.eq.s32.totalorder %s21, 1
      %p137 = por %p135, %p136
      %p138 = scmp.ne.s32.totalorder %s129, %s130
      %p139 = scmp.eq.s32.totalorder %s21, 0
      %p140 = por %p138, %p139
      %p141 = scmp.ne.s32.totalorder %s129, %s130
      %p142 = scmp.eq.s32.totalorder %s22, 1
      %p143 = por %p141, %p142
      %p145 = scmp.ne.s32.totalorder %s130, %s144
      %p146 = scmp.eq.s32.totalorder %s22, 0
      %p147 = por %p145, %p146
      %s149 = sadd.s32 %s148, 1
      %p152 = scmp.eq.s32.totalorder %s16, 1
      %p153 = scmp.ne.s32.totalorder %s148, %s150
      %p154 = scmp.eq.s32.totalorder %s16, 0
      %p155 = por %p153, %p154
      %p156 = scmp.ne.s32.totalorder %s148, %s150
      %p157 = scmp.eq.s32.totalorder %s21, 1
      %p158 = por %p156, %p157
      %p159 = scmp.ne.s32.totalorder %s150, %s151
      %p160 = scmp.eq.s32.totalorder %s21, 0
      %p161 = por %p159, %p160
      %p162 = scmp.ne.s32.totalorder %s150, %s151
      %p163 = scmp.eq.s32.totalorder %s22, 1
      %p164 = por %p162, %p163
      %p166 = scmp.ne.s32.totalorder %s151, %s165
      %p167 = scmp.eq.s32.totalorder %s22, 0
      %p168 = por %p166, %p167
      %s170 = sadd.s32 %s169, 1
      %p173 = scmp.eq.s32.totalorder %s16, 1
      %p174 = scmp.ne.s32.totalorder %s169, %s171
      %p175 = scmp.eq.s32.totalorder %s16, 0
      %p176 = por %p174, %p175
      %p177 = scmp.ne.s32.totalorder %s169, %s171
      %p178 = scmp.eq.s32.totalorder %s21, 1
      %p179 = por %p177, %p178
      %p180 = scmp.ne.s32.totalorder %s171, %s172
      %p181 = scmp.eq.s32.totalorder %s21, 0
      %p182 = por %p180, %p181
      %p183 = scmp.ne.s32.totalorder %s171, %s172
      %p184 = scmp.eq.s32.totalorder %s22, 1
      %p185 = por %p183, %p184
      %p187 = scmp.ne.s32.totalorder %s172, %s186
      %p188 = scmp.eq.s32.totalorder %s22, 0
      %p189 = por %p187, %p188
      %s190 = ssub.s32 %s23, %s35
      %s191 = ssub.s32 %s24, %s31
      %s192 = sor.u32 %s190, %s191
      %p193 = scmp.eq.s32.totalorder %s192, 0
      %s195 = sadd.s32 %s194, 1
      %s196 = scalar_select %p193, %s194, %s195
      %p199 = pneg %p193
      %p200 = scmp.eq.s32.totalorder %s16, 1
      %p201 = por %p199, %p200
      %p202 = scmp.ne.s32.totalorder %s194, %s197
      %p203 = scmp.eq.s32.totalorder %s16, 0
      %p204 = por %p202, %p203
      %p205 = scmp.ne.s32.totalorder %s194, %s197
      %p206 = scmp.eq.s32.totalorder %s21, 1
      %p207 = por %p205, %p206
      %p208 = scmp.ne.s32.totalorder %s197, %s198
      %p209 = scmp.eq.s32.totalorder %s21, 0
      %p210 = por %p208, %p209
      %p211 = scmp.ne.s32.totalorder %s197, %s198
      %p212 = scmp.eq.s32.totalorder %s22, 1
      %p213 = por %p211, %p212
      %p215 = scmp.ne.s32.totalorder %s198, %s214
      %p216 = scmp.eq.s32.totalorder %s22, 0
      %p217 = por %p215, %p216
      %p218 = scmp.le.s32.totalorder 1, %s16
      %p219 = scmp.lt.s32.totalorder %s16, 3
      %p220 = pnand %p218, %p219
      %p221 = pneg %p220
      // Predicated region
      $region9: #{tpu_custom_call.1} parent=5 // pred_check
        _
      $region10: #{tpu_custom_call.1} parent=5 // pred_check_branch
        %223 = sbr.rel (%p220) target = $region12
      $region11: #{tpu_custom_call.1} parent=5 // pred_region
        %s224 = ssub.s32 %s16, 1
        // Predicated region
        $region13: #{tpu_custom_call.1} parent=11 // pred_check
          %p225 = pneg %p77
        $region14: #{tpu_custom_call.1} parent=11 // pred_check_branch
          %227 = sbr.rel (%p225) target = $region16
        $region15: #{tpu_custom_call.1} parent=11 // pred_region
          _
        $region16: #{tpu_custom_call.1} parent=11 // pred_fallthru
          _
        // Predicated region
        $region17: #{tpu_custom_call.1} parent=11 // pred_check
          %p228 = pneg %p98
        $region18: #{tpu_custom_call.1} parent=11 // pred_check_branch
          %230 = sbr.rel (%p228) target = $region20
        $region19: #{tpu_custom_call.1} parent=11 // pred_region
          _
        $region20: #{tpu_custom_call.1} parent=11 // pred_fallthru
          _
        // Predicated region
        $region21: #{tpu_custom_call.1} parent=11 // pred_check
          %p231 = pneg %p119
        $region22: #{tpu_custom_call.1} parent=11 // pred_check_branch
          %233 = sbr.rel (%p231) target = $region24
        $region23: #{tpu_custom_call.1} parent=11 // pred_region
          _
        $region24: #{tpu_custom_call.1} parent=11 // pred_fallthru
          _
        // Predicated region
        $region25: #{tpu_custom_call.1} parent=11 // pred_check
          %p234 = pneg %p140
        $region26: #{tpu_custom_call.1} parent=11 // pred_check_branch
          %236 = sbr.rel (%p234) target = $region28
        $region27: #{tpu_custom_call.1} parent=11 // pred_region
          _
        $region28: #{tpu_custom_call.1} parent=11 // pred_fallthru
          _
        // Predicated region
        $region29: #{tpu_custom_call.1} parent=11 // pred_check
          %p237 = pneg %p161
        $region30: #{tpu_custom_call.1} parent=11 // pred_check_branch
          %239 = sbr.rel (%p237) target = $region32
        $region31: #{tpu_custom_call.1} parent=11 // pred_region
          _
        $region32: #{tpu_custom_call.1} parent=11 // pred_fallthru
          _
        // Predicated region
        $region33: #{tpu_custom_call.1} parent=11 // pred_check
          %p240 = pneg %p182
        $region34: #{tpu_custom_call.1} parent=11 // pred_check_branch
          %242 = sbr.rel (%p240) target = $region36
        $region35: #{tpu_custom_call.1} parent=11 // pred_region
          _
        $region36: #{tpu_custom_call.1} parent=11 // pred_fallthru
          _
      $region12: #{tpu_custom_call.1} parent=5 // pred_fallthru
        _
      %p243 = scmp.lt.s32.totalorder %s16, 2
      // Predicated region
      $region37: #{tpu_custom_call.1} parent=5 // pred_check
        %p244 = pneg %p243
      $region38: #{tpu_custom_call.1} parent=5 // pred_check_branch
        %246 = sbr.rel (%p244) target = $region40
      $region39: #{tpu_custom_call.1} parent=5 // pred_region
        // Predicated region
        $region41: #{tpu_custom_call.1} parent=39 // pred_check
          %p247 = pneg %p50
        $region42: #{tpu_custom_call.1} parent=39 // pred_check_branch
          %249 = sbr.rel (%p247) target = $region44
        $region43: #{tpu_custom_call.1} parent=39 // pred_region
          %s250 = smul.u32 2, %s24
          %p251 = scmp.lt.s32.totalorder %s23, 1
          %s252 = scalar_select %p251, %s23, 1
          %p253 = scmp.lt.s32.totalorder %s250, 1
          %s254 = scalar_select %p253, %s250, 1
          %s255 = smul.addr %s252, 8
          %s256 = sadd.s32 %s254, %s255
          %s257 = smul.addr %s256, 8
          %s258 = scalar_lea.vmem %s0, %s257
          %s259 = smul.u32 2, %s24
        $region44: #{tpu_custom_call.1} parent=39 // pred_fallthru
          _
      $region40: #{tpu_custom_call.1} parent=5 // pred_fallthru
        _
      %p260 = scmp.le.s32.totalorder 1, %s16
      %p261 = scmp.lt.s32.totalorder %s16, 3
      %p262 = pnand %p260, %p261
      %p263 = pneg %p262
      // Predicated region
      $region45: #{tpu_custom_call.1} parent=5 // pred_check
        _
      $region46: #{tpu_custom_call.1} parent=5 // pred_check_branch
        %265 = sbr.rel (%p262) target = $region48
      $region47: #{tpu_custom_call.1} parent=5 // pred_region
        %s266 = ssub.s32 %s16, 1
        %s267 = smul.u32 2, %s26
        %p268 = scmp.lt.s32.totalorder %s25, 1
        %s269 = scalar_select %p268, %s25, 1
        %p270 = scmp.lt.s32.totalorder %s267, 1
        %s271 = scalar_select %p270, %s267, 1
        %s272 = smul.addr %s269, 8
        %s273 = sadd.s32 %s271, %s272
        %s274 = smul.addr %s273, 8
        %s275 = scalar_lea.vmem %s0, %s274
        %p276 = pneg %p56
        %p277 = pneg %p53
        %p278 = pneg %p77
        %p279 = pneg %p74
        %p280 = pneg %p98
        %p281 = pneg %p95
        %p282 = pneg %p119
        %p283 = pneg %p116
        %p284 = pneg %p140
        %p285 = pneg %p137
        %p286 = pneg %p161
        %p287 = pneg %p158
        %p288 = pneg %p182
        %p289 = pneg %p179
        %p290 = pneg %p210
        %p291 = pneg %p207
        %s292 = sand.u32 %s197, 1
        %s293 = scalar_lea.sflag [#allocation3], %s292
        %s294 = sand.u32 %s197, 1
        %s295 = smul.addr %s294, 64
        %s296 = scalar_lea.vmem [#allocation2], %s295
        %s297 = smul.u32 2, %s26
        %p298 = scmp.lt.s32.totalorder %s25, 1
        %s299 = scalar_select %p298, %s25, 1
        %p300 = scmp.lt.s32.totalorder %s297, 1
        %s301 = scalar_select %p300, %s297, 1
        %s302 = smul.addr %s299, 8
        %s303 = sadd.s32 %s301, %s302
        %s304 = smul.addr %s303, 8
        %s305 = scalar_lea.vmem %s0, %s304
        %s306 = smul.u32 2, %s26
        %s307 = smul.u32 2, %s26
        %v309 = vld [vmem:[%s305] sm:$0xff]
        %v310 = vld [vmem:[%s305 + $0x8] sm:$0xff]
        %v311 = vld [vmem:[%s305 + $0x10] sm:$0xff]
        %v312 = vld [vmem:[%s305 + $0x18] sm:$0xff]
        %v313 = vld [vmem:[%s305 + $0x20] sm:$0xff]
        %v314 = vld [vmem:[%s305 + $0x28] sm:$0xff]
        %v315 = vld [vmem:[%s305 + $0x30] sm:$0xff]
        %v316 = vld [vmem:[%s305 + $0x38] sm:$0xff]
        %v317 = vpack.c.bf16 %v311, %v309
        %v318 = vpack.c.bf16 %v312, %v310
        %v319 = vpack.c.bf16 %v315, %v313
        %v320 = vpack.c.bf16 %v316, %v314
        %v321 = vld [vmem:[%s1] sm:$0xf]
        %v322 = vld [vmem:[%s1 + $0x4] sm:$0xf]
        %v323 = vld [vmem:[%s1 + $0x8] sm:$0xf]
        %v324 = vld [vmem:[%s1 + $0xc] sm:$0xf]
        %v325 = vld [vmem:[%s1 + $0x10] sm:$0xf]
        %v326 = vld [vmem:[%s1 + $0x14] sm:$0xf]
        %v327 = vld [vmem:[%s1 + $0x18] sm:$0xf]
        %v328 = vld [vmem:[%s1 + $0x1c] sm:$0xf]
        %v329 = vld [vmem:[%s1 + $0x20] sm:$0xf]
        %v330 = vld [vmem:[%s2] sm:$0xff]
        %v331 = vld [vmem:[%s2 + $0x8] sm:$0xff]
        %v332 = vld [vmem:[%s2 + $0x10] sm:$0xff]
        %v333 = vld [vmem:[%s2 + $0x18] sm:$0xff]
        %v334 = vld [vmem:[%s2 + $0x20] sm:$0xff]
        %v335 = vld [vmem:[%s2 + $0x28] sm:$0xff]
        %v336 = vld [vmem:[%s2 + $0x30] sm:$0xff]
        %v337 = vld [vmem:[%s2 + $0x38] sm:$0xff]
        %v338 = vld [vmem:[%s2 + $0x40] sm:$0xff]
        %340 = vset.pattern.permute.xlu0 0
        %341 = vperm.xlu0 %340, %v330
        %v342 = vpop.permute.xlu0 %341
        %345 = vset.pattern.permute.xlu0 0
        %346 = vperm.xlu0 %345, %v331
        %v347 = vpop.permute.xlu0 %346
        %350 = vset.pattern.permute.xlu0 0
        %351 = vperm.xlu0 %350, %v332
        %v352 = vpop.permute.xlu0 %351
        %355 = vset.pattern.permute.xlu0 0
        %356 = vperm.xlu0 %355, %v333
        %v357 = vpop.permute.xlu0 %356
        %360 = vset.pattern.permute.xlu0 0
        %361 = vperm.xlu0 %360, %v334
        %v362 = vpop.permute.xlu0 %361
        %365 = vset.pattern.permute.xlu0 0
        %366 = vperm.xlu0 %365, %v335
        %v367 = vpop.permute.xlu0 %366
        %370 = vset.pattern.permute.xlu0 0
        %371 = vperm.xlu0 %370, %v336
        %v372 = vpop.permute.xlu0 %371
        %375 = vset.pattern.permute.xlu0 0
        %376 = vperm.xlu0 %375, %v337
        %v377 = vpop.permute.xlu0 %376
        %380 = vset.pattern.permute.xlu0 0
        %381 = vperm.xlu0 %380, %v338
        %v382 = vpop.permute.xlu0 %381
        %v393 = vunpack.c.l.b16 %v321
        %v394 = vunpack.c.l.b16 %v322
        %v395 = vunpack.c.l.b16 %v323
        %v396 = vunpack.c.l.b16 %v324
        %v397 = vunpack.c.l.b16 %v325
        %v398 = vunpack.c.l.b16 %v326
        %v399 = vunpack.c.l.b16 %v327
        %v400 = vunpack.c.l.b16 %v328
        %v401 = vunpack.c.l.b16 %v329
        %v402 = vpack.c.b16 %v394, %v393
        %v403 = vpack.c.b16 %v396, %v395
        %v404 = vpack.c.b16 %v398, %v397
        %v405 = vpack.c.b16 %v400, %v399
        %v406 = vpack.c.b16 %v401, %v401
        %vm407 = vcmask 261120
        %v409 = vsel %vm407, %v402, 0
        %v412 = vsel %vm407, %v403, 0
        %v415 = vsel %vm407, %v404, 0
        %v418 = vsel %vm407, %v405, 0
        %v421 = vsel %vm407, %v406, 0
        %423 = vmatprep.subr.bf16.mxu0 %v318
        %424 = vmatpush1.bf16.msra.mxu0 %v317
        %425 = vmatprep.subr.bf16.mxu0 %v320
        %426 = vmatpush1.bf16.msra.mxu0 %v319
        %427 = vmatprep.subr.bf16.mxu0 0
        %428 = vmatpush1.bf16.msra.mxu0 0
        %429 = vmatprep.subr.bf16.mxu0 0
        %430 = vmatpush1.bf16.msra.mxu0 0
        %431 = vmatprep.subr.bf16.mxu0 0
        %432 = vmatpush1.bf16.msra.mxu0 0
        %433 = vmatprep.subr.bf16.mxu0 0
        %434 = vmatpush1.bf16.msra.mxu0 0
        %435 = vmatprep.subr.bf16.mxu0 0
        %436 = vmatpush1.bf16.msra.mxu0 0
        %437 = vmatprep.subr.bf16.mxu0 0
        %438 = vmatpush1.bf16.msra.mxu0 0
        %439 = vmatprep.subr.bf16.mxu0 0
        %440 = vmatpush1.bf16.msra.mxu0 0
        %441 = vmatprep.subr.bf16.mxu0 0
        %442 = vmatpush1.bf16.msra.mxu0 0
        %443 = vmatprep.subr.bf16.mxu0 0
        %444 = vmatpush1.bf16.msra.mxu0 0
        %445 = vmatprep.subr.bf16.mxu0 0
        %446 = vmatpush1.bf16.msra.mxu0 0
        %447 = vmatprep.subr.bf16.mxu0 0
        %448 = vmatpush1.bf16.msra.mxu0 0
        %449 = vmatprep.subr.bf16.mxu0 0
        %450 = vmatpush1.bf16.msra.mxu0 0
        %451 = vmatprep.subr.bf16.mxu0 0
        %452 = vmatpush1.bf16.msra.mxu0 0
        %453 = vmatprep.subr.bf16.mxu0 0
        %454 = vmatpush1.bf16.msra.mxu0 0
        %455 = vmatprep.mubr.bf16.mxu0 0
        %456 = vmatmul.mubr.bf16.gmra.mrb[0].mxu0 %v409
        %v457 = vpop.f32.mrb[0].mxu0
        %v458 = vadd.f32 %v342, %v457
        %v459 = vpop.f32.mrb[0].mxu0
        %v460 = vadd.f32 %v342, %v459
        %v461 = vpop.f32.mrb[0].mxu0
        %v462 = vadd.f32 %v347, %v461
        %v463 = vpop.f32.mrb[0].mxu0
        %v464 = vadd.f32 %v347, %v463
        %465 = vmatprep.mubr.bf16.mxu0 0
        %466 = vmatmul.mubr.bf16.gmra.mrb[0].mxu0 %v412
        %v467 = vpop.f32.mrb[0].mxu0
        %v468 = vadd.f32 %v352, %v467
        %v469 = vpop.f32.mrb[0].mxu0
        %v470 = vadd.f32 %v352, %v469
        %v471 = vpop.f32.mrb[0].mxu0
        %v472 = vadd.f32 %v357, %v471
        %v473 = vpop.f32.mrb[0].mxu0
        %v474 = vadd.f32 %v357, %v473
        %475 = vmatprep.mubr.bf16.mxu0 0
        %476 = vmatmul.mubr.bf16.gmra.mrb[0].mxu0 %v415
        %v477 = vpop.f32.mrb[0].mxu0
        %v478 = vadd.f32 %v362, %v477
        %v479 = vpop.f32.mrb[0].mxu0
        %v480 = vadd.f32 %v362, %v479
        %v481 = vpop.f32.mrb[0].mxu0
        %v482 = vadd.f32 %v367, %v481
        %v483 = vpop.f32.mrb[0].mxu0
        %v484 = vadd.f32 %v367, %v483
        %485 = vmatprep.mubr.bf16.mxu0 0
        %486 = vmatmul.mubr.bf16.gmra.mrb[0].mxu0 %v418
        %v487 = vpop.f32.mrb[0].mxu0
        %v488 = vadd.f32 %v372, %v487
        %v489 = vpop.f32.mrb[0].mxu0
        %v490 = vadd.f32 %v372, %v489
        %v491 = vpop.f32.mrb[0].mxu0
        %v492 = vadd.f32 %v377, %v491
        %v493 = vpop.f32.mrb[0].mxu0
        %v494 = vadd.f32 %v377, %v493
        %495 = vmatprep.mubr.bf16.mxu0 0
        %496 = vmatmul.mubr.bf16.gmra.mrb[0].mxu0 %v421
        %v497 = vpop.f32.mrb[0].mxu0
        %v498 = vadd.f32 %v382, %v497
        %v499 = vpop.f32.mrb[0].mxu0
        %v500 = vadd.f32 %v382, %v499
        %v501 = vpop.f32.mrb[0].mxu0
        %v502 = vpop.f32.mrb[0].mxu0
        %503 = vdwg.mxu0
        %v504 = vmax.f32 %v458, 0.0
        %v505 = vmax.f32 %v460, 0.0
        %v506 = vmax.f32 %v462, 0.0
        %v507 = vmax.f32 %v464, 0.0
        %v508 = vmax.f32 %v468, 0.0
        %v509 = vmax.f32 %v470, 0.0
        %v510 = vmax.f32 %v472, 0.0
        %v511 = vmax.f32 %v474, 0.0
        %v512 = vmax.f32 %v478, 0.0
        %v513 = vmax.f32 %v480, 0.0
        %v514 = vmax.f32 %v482, 0.0
        %v515 = vmax.f32 %v484, 0.0
        %v516 = vmax.f32 %v488, 0.0
        %v517 = vmax.f32 %v490, 0.0
        %v518 = vmax.f32 %v492, 0.0
        %v519 = vmax.f32 %v494, 0.0
        %v520 = vmax.f32 %v498, 0.0
        %v521 = vmax.f32 %v500, 0.0
        %v522 = vld [vmem:[%s3] sm:$0xf]
        %v523 = vld [vmem:[%s3 + $0x4] sm:$0xf]
        %v524 = vld [vmem:[%s3 + $0x8] sm:$0xf]
        %v525 = vld [vmem:[%s3 + $0xc] sm:$0xf]
        %v526 = vpack.c.bf16 %v506, %v504
        %v527 = vpack.c.bf16 %v507, %v505
        %v528 = vpack.c.bf16 %v510, %v508
        %v529 = vpack.c.bf16 %v511, %v509
        %v530 = vpack.c.bf16 %v514, %v512
        %v531 = vpack.c.bf16 %v515, %v513
        %v532 = vpack.c.bf16 %v518, %v516
        %v533 = vpack.c.bf16 %v519, %v517
        %v534 = vld [vmem:[%s4] sm:$0xff]
        %v535 = vld [vmem:[%s4 + $0x8] sm:$0xff]
        %v536 = vld [vmem:[%s4 + $0x10] sm:$0xff]
        %v537 = vld [vmem:[%s4 + $0x18] sm:$0xff]
        %539 = vset.pattern.permute.xlu0 0
        %540 = vperm.xlu0 %539, %v534
        %v541 = vpop.permute.xlu0 %540
        %544 = vset.pattern.permute.xlu0 0
        %545 = vperm.xlu0 %544, %v535
        %v546 = vpop.permute.xlu0 %545
        %549 = vset.pattern.permute.xlu0 0
        %550 = vperm.xlu0 %549, %v536
        %v551 = vpop.permute.xlu0 %550
        %554 = vset.pattern.permute.xlu0 0
        %555 = vperm.xlu0 %554, %v537
        %v556 = vpop.permute.xlu0 %555
        %v562 = vunpack.c.l.b16 %v522
        %v563 = vunpack.c.l.b16 %v523
        %v564 = vunpack.c.l.b16 %v524
        %v565 = vunpack.c.l.b16 %v525
        %v566 = vpack.c.b16 %v563, %v562
        %v567 = vpack.c.b16 %v565, %v564
        %vm568 = vcmask 523264
        %v570 = vsel %vm568, %v566, 0
        %v573 = vsel %vm568, %v567, 0
        %575 = vmatprep.subr.bf16.mxu0 %v527
        %576 = vmatpush1.bf16.msra.mxu0 %v526
        %577 = vmatprep.subr.bf16.mxu0 %v529
        %578 = vmatpush1.bf16.msra.mxu0 %v528
        %579 = vmatprep.subr.bf16.mxu0 %v531
        %580 = vmatpush1.bf16.msra.mxu0 %v530
        %581 = vmatprep.subr.bf16.mxu0 %v533
        %582 = vmatpush1.bf16.msra.mxu0 %v532
        %583 = vmatprep.subr.bf16.mxu0 0
        %584 = vmatpush1.bf16.msra.mxu0 0
        %585 = vmatprep.subr.bf16.mxu0 0
        %586 = vmatpush1.bf16.msra.mxu0 0
        %587 = vmatprep.subr.bf16.mxu0 0
        %588 = vmatpush1.bf16.msra.mxu0 0
        %589 = vmatprep.subr.bf16.mxu0 0
        %590 = vmatpush1.bf16.msra.mxu0 0
        %591 = vmatprep.subr.bf16.mxu0 0
        %592 = vmatpush1.bf16.msra.mxu0 0
        %593 = vmatprep.subr.bf16.mxu0 0
        %594 = vmatpush1.bf16.msra.mxu0 0
        %595 = vmatprep.subr.bf16.mxu0 0
        %596 = vmatpush1.bf16.msra.mxu0 0
        %597 = vmatprep.subr.bf16.mxu0 0
        %598 = vmatpush1.bf16.msra.mxu0 0
        %599 = vmatprep.subr.bf16.mxu0 0
        %600 = vmatpush1.bf16.msra.mxu0 0
        %601 = vmatprep.subr.bf16.mxu0 0
        %602 = vmatpush1.bf16.msra.mxu0 0
        %603 = vmatprep.subr.bf16.mxu0 0
        %604 = vmatpush1.bf16.msra.mxu0 0
        %605 = vmatprep.subr.bf16.mxu0 0
        %606 = vmatpush1.bf16.msra.mxu0 0
        %607 = vmatprep.mubr.bf16.mxu0 0
        %608 = vmatmul.mubr.bf16.gmra.mrb[0].mxu0 %v570
        %v609 = vpop.f32.mrb[0].mxu0
        %v610 = vadd.f32 %v541, %v609
        %v611 = vpop.f32.mrb[0].mxu0
        %v612 = vadd.f32 %v541, %v611
        %v613 = vpop.f32.mrb[0].mxu0
        %v614 = vadd.f32 %v546, %v613
        %v615 = vpop.f32.mrb[0].mxu0
        %v616 = vadd.f32 %v546, %v615
        %617 = vmatprep.mubr.bf16.mxu0 0
        %618 = vmatmul.mubr.bf16.gmra.mrb[0].mxu0 %v573
        %v619 = vpop.f32.mrb[0].mxu0
        %v620 = vadd.f32 %v551, %v619
        %v621 = vpop.f32.mrb[0].mxu0
        %v622 = vadd.f32 %v551, %v621
        %v623 = vpop.f32.mrb[0].mxu0
        %v624 = vadd.f32 %v556, %v623
        %v625 = vpop.f32.mrb[0].mxu0
        %v626 = vadd.f32 %v556, %v625
        %627 = vdwg.mxu0
        %v628 = vld [vmem:[%s5] sm:$0xf]
        %v629 = vld [vmem:[%s5 + $0x4] sm:$0xf]
        %v630 = vld [vmem:[%s5 + $0x8] sm:$0xf]
        %v631 = vld [vmem:[%s5 + $0xc] sm:$0xf]
        %v632 = vpack.c.bf16 %v520, %v520
        %v633 = vpack.c.bf16 %v521, %v521
        %v634 = vld [vmem:[%s6] sm:$0xff]
        %v635 = vld [vmem:[%s6 + $0x8] sm:$0xff]
        %v636 = vld [vmem:[%s6 + $0x10] sm:$0xff]
        %v637 = vld [vmem:[%s6 + $0x18] sm:$0xff]
        %639 = vset.pattern.permute.xlu0 0
        %640 = vperm.xlu0 %639, %v634
        %v641 = vpop.permute.xlu0 %640
        %644 = vset.pattern.permute.xlu0 0
        %645 = vperm.xlu0 %644, %v635
        %v646 = vpop.permute.xlu0 %645
        %649 = vset.pattern.permute.xlu0 0
        %650 = vperm.xlu0 %649, %v636
        %v651 = vpop.permute.xlu0 %650
        %654 = vset.pattern.permute.xlu0 0
        %655 = vperm.xlu0 %654, %v637
        %v656 = vpop.permute.xlu0 %655
        %v662 = vunpack.c.l.b16 %v628
        %v663 = vunpack.c.l.b16 %v629
        %v664 = vunpack.c.l.b16 %v630
        %v665 = vunpack.c.l.b16 %v631
        %v666 = vpack.c.b16 %v663, %v662
        %v667 = vpack.c.b16 %v665, %v664
        %vm668 = vcmask 64512
        %v670 = vsel %vm668, %v666, 0
        %v673 = vsel %vm668, %v667, 0
        %vm675 = vcmask 1043456
        %v677 = vsel %vm675, %v632, 0
        %v680 = vsel %vm675, %v633, 0
        %682 = vmatprep.subr.bf16.mxu0 %v680
        %683 = vmatpush1.bf16.msra.mxu0 %v677
        %684 = vmatprep.subr.bf16.mxu0 0
        %685 = vmatpush1.bf16.msra.mxu0 0
        %686 = vmatprep.subr.bf16.mxu0 0
        %687 = vmatpush1.bf16.msra.mxu0 0
        %688 = vmatprep.subr.bf16.mxu0 0
        %689 = vmatpush1.bf16.msra.mxu0 0
        %690 = vmatprep.subr.bf16.mxu0 0
        %691 = vmatpush1.bf16.msra.mxu0 0
        %692 = vmatprep.subr.bf16.mxu0 0
        %693 = vmatpush1.bf16.msra.mxu0 0
        %694 = vmatprep.subr.bf16.mxu0 0
        %695 = vmatpush1.bf16.msra.mxu0 0
        %696 = vmatprep.subr.bf16.mxu0 0
        %697 = vmatpush1.bf16.msra.mxu0 0
        %698 = vmatprep.subr.bf16.mxu0 0
        %699 = vmatpush1.bf16.msra.mxu0 0
        %700 = vmatprep.subr.bf16.mxu0 0
        %701 = vmatpush1.bf16.msra.mxu0 0
        %702 = vmatprep.subr.bf16.mxu0 0
        %703 = vmatpush1.bf16.msra.mxu0 0
        %704 = vmatprep.subr.bf16.mxu0 0
        %705 = vmatpush1.bf16.msra.mxu0 0
        %706 = vmatprep.subr.bf16.mxu0 0
        %707 = vmatpush1.bf16.msra.mxu0 0
        %708 = vmatprep.subr.bf16.mxu0 0
        %709 = vmatpush1.bf16.msra.mxu0 0
        %710 = vmatprep.subr.bf16.mxu0 0
        %711 = vmatpush1.bf16.msra.mxu0 0
        %712 = vmatprep.subr.bf16.mxu0 0
        %713 = vmatpush1.bf16.msra.mxu0 0
        %714 = vmatprep.mubr.bf16.mxu0 0
        %715 = vmatmul.mubr.bf16.gmra.mrb[0].mxu0 %v670
        %v716 = vpop.f32.mrb[0].mxu0
        %v717 = vadd.f32 %v641, %v716
        %v718 = vpop.f32.mrb[0].mxu0
        %v719 = vadd.f32 %v641, %v718
        %v720 = vpop.f32.mrb[0].mxu0
        %v721 = vadd.f32 %v646, %v720
        %v722 = vpop.f32.mrb[0].mxu0
        %v723 = vadd.f32 %v646, %v722
        %724 = vmatprep.mubr.bf16.mxu0 0
        %725 = vmatmul.mubr.bf16.gmra.mrb[0].mxu0 %v673
        %v726 = vpop.f32.mrb[0].mxu0
        %v727 = vadd.f32 %v651, %v726
        %v728 = vpop.f32.mrb[0].mxu0
        %v729 = vadd.f32 %v651, %v728
        %v730 = vpop.f32.mrb[0].mxu0
        %v731 = vadd.f32 %v656, %v730
        %v732 = vpop.f32.mrb[0].mxu0
        %v733 = vadd.f32 %v656, %v732
        %734 = vdwg.mxu0
        %v735 = vxor.u32 %v717, 2147483648
        %v736 = vxor.u32 %v719, 2147483648
        %v737 = vxor.u32 %v721, 2147483648
        %v738 = vxor.u32 %v723, 2147483648
        %v739 = vxor.u32 %v727, 2147483648
        %v740 = vxor.u32 %v729, 2147483648
        %v741 = vxor.u32 %v731, 2147483648
        %v742 = vxor.u32 %v733, 2147483648
        %v743 = vmul.f32 %v735, 1.442695
        %v744 = vpow.pop %v743
        %v745 = vmul.f32 %v736, 1.442695
        %v746 = vpow.pop %v745
        %v747 = vmul.f32 %v737, 1.442695
        %v748 = vpow.pop %v747
        %v749 = vmul.f32 %v738, 1.442695
        %v750 = vpow.pop %v749
        %v751 = vmul.f32 %v739, 1.442695
        %v752 = vpow.pop %v751
        %v753 = vmul.f32 %v740, 1.442695
        %v754 = vpow.pop %v753
        %v755 = vmul.f32 %v741, 1.442695
        %v756 = vpow.pop %v755
        %v757 = vmul.f32 %v742, 1.442695
        %v758 = vpow.pop %v757
        %v759 = vadd.f32 %v744, 1.0
        %v760 = vadd.f32 %v746, 1.0
        %v761 = vadd.f32 %v748, 1.0
        %v762 = vadd.f32 %v750, 1.0
        %v763 = vadd.f32 %v752, 1.0
        %v764 = vadd.f32 %v754, 1.0
        %v765 = vadd.f32 %v756, 1.0
        %v766 = vadd.f32 %v758, 1.0
        %v767 = vrcp.pop %v759
        %v768 = vmul.f32 1.0, %v767
        %v769 = vrcp.pop %v760
        %v770 = vmul.f32 1.0, %v769
        %v771 = vrcp.pop %v761
        %v772 = vmul.f32 1.0, %v771
        %v773 = vrcp.pop %v762
        %v774 = vmul.f32 1.0, %v773
        %v775 = vrcp.pop %v763
        %v776 = vmul.f32 1.0, %v775
        %v777 = vrcp.pop %v764
        %v778 = vmul.f32 1.0, %v777
        %v779 = vrcp.pop %v765
        %v780 = vmul.f32 1.0, %v779
        %v781 = vrcp.pop %v766
        %v782 = vmul.f32 1.0, %v781
        %v783 = vsub.f32 %v309, %v610
        %v784 = vsub.f32 %v310, %v612
        %v785 = vsub.f32 %v311, %v614
        %v786 = vsub.f32 %v312, %v616
        %v787 = vsub.f32 %v313, %v620
        %v788 = vsub.f32 %v314, %v622
        %v789 = vsub.f32 %v315, %v624
        %v790 = vsub.f32 %v316, %v626
        %v791 = vmul.f32 %v768, %v783
        %v792 = vmul.f32 %v770, %v784
        %v793 = vmul.f32 %v772, %v785
        %v794 = vmul.f32 %v774, %v786
        %v795 = vmul.f32 %v776, %v787
        %v796 = vmul.f32 %v778, %v788
        %v797 = vmul.f32 %v780, %v789
        %v798 = vmul.f32 %v782, %v790
        %v799 = vadd.f32 %v610, %v791
        %v800 = vadd.f32 %v612, %v792
        %v801 = vadd.f32 %v614, %v793
        %v802 = vadd.f32 %v616, %v794
        %v803 = vadd.f32 %v620, %v795
        %v804 = vadd.f32 %v622, %v796
        %v805 = vadd.f32 %v624, %v797
        %v806 = vadd.f32 %v626, %v798
        %807 = vst [vmem:[%s296] sm:$0xff] %v799
        %808 = vst [vmem:[%s296 + $0x8] sm:$0xff] %v800
        %809 = vst [vmem:[%s296 + $0x10] sm:$0xff] %v801
        %810 = vst [vmem:[%s296 + $0x18] sm:$0xff] %v802
        %811 = vst [vmem:[%s296 + $0x20] sm:$0xff] %v803
        %812 = vst [vmem:[%s296 + $0x28] sm:$0xff] %v804
        %813 = vst [vmem:[%s296 + $0x30] sm:$0xff] %v805
        %814 = vst [vmem:[%s296 + $0x38] sm:$0xff] %v806
        %s815 = sand.u32 %s197, 1
        %s816 = scalar_lea.sflag [#allocation3], %s815
        %s817 = sand.u32 %s197, 1
        %s818 = smul.addr %s817, 64
        %s819 = scalar_lea.vmem [#allocation2], %s818
        // Predicated region
        $region49: #{tpu_custom_call.1} parent=47 // pred_check
          %p820 = pneg %p207
        $region50: #{tpu_custom_call.1} parent=47 // pred_check_branch
          %822 = sbr.rel (%p820) target = $region52
        $region51: #{tpu_custom_call.1} parent=47 // pred_region
          %s823 = smul.u32 2, %s26
          %s825 = ssub.s32 1024, 1024
          %826 = vsyncadd %s816, %s825
          %s827 = smul.addr %s25, 8
          %s828 = sadd.s32 %s823, %s827
          %s829 = smul.addr %s828, 128
          %s830 = scalar_lea.hbm %s7, %s829
          %s831 = sshll.u32 %s819, 4
          %s832 = int_to_ptr.vmem [resolvable:$true] %s831
          %837 = dma.vmem_to_hbm [thread:$0]  %s832, 1024, %s830, %s816, 256, 256, 16
        $region52: #{tpu_custom_call.1} parent=47 // pred_fallthru
          _
      $region48: #{tpu_custom_call.1} parent=5 // pred_fallthru
        _
      %p838 = scmp.le.s32.totalorder 2, %s16
      // Predicated region
      $region53: #{tpu_custom_call.1} parent=5 // pred_check
        %p839 = pneg %p838
      $region54: #{tpu_custom_call.1} parent=5 // pred_check_branch
        %841 = sbr.rel (%p839) target = $region56
      $region55: #{tpu_custom_call.1} parent=5 // pred_region
        %s842 = ssub.s32 %s16, 2
        // Predicated region
        $region57: #{tpu_custom_call.1} parent=55 // pred_check
          %p843 = pneg %p213
        $region58: #{tpu_custom_call.1} parent=55 // pred_check_branch
          %845 = sbr.rel (%p843) target = $region60
        $region59: #{tpu_custom_call.1} parent=55 // pred_region
          %s846 = sand.u32 %s198, 1
          %s847 = scalar_lea.sflag [#allocation3], %s846
          %s848 = sand.u32 %s198, 1
          %s849 = smul.addr %s848, 64
          %s850 = scalar_lea.vmem [#allocation2], %s849
          %851 = dma.done %s847, 1024
        $region60: #{tpu_custom_call.1} parent=55 // pred_fallthru
          _
      $region56: #{tpu_custom_call.1} parent=5 // pred_fallthru
        _
    $region6: #{tpu_custom_call.1} parent=1 // loop_footer
      %s20 = sadd.s32 1, %s16
    $region7: #{tpu_custom_call.1} parent=1 // loop_footer_branch
      %15 = sbr.rel target = $region3
    $region8: #{tpu_custom_call.1} parent=1 // loop_exit
      _
    %852 = vsyncpa [#allocation3], 1
    %s853 = scalar_lea.sflag [#allocation3], 1
    %854 = vsyncpa %s853, 1

</llo_original>
